<compile_context>
chip_gen: v5e
topology: v5e:2x2
jax: 0.10.0
libtpu: 0.0.40
codegen_flags: <defaults>
</compile_context>

<pallas_src>
import numpy as np
import jax
import jax.numpy as jnp
from jax.experimental import pallas as pl
from jax.experimental.pallas import tpu as pltpu

# ---- model hyper-parameters (small, consistent with the PyTorch module) ----
NUM_LAYERS = 2
D_MODEL = 32
NUM_HEADS = 4
D_K = D_MODEL // NUM_HEADS
CONV_HIDDEN = 64
VOCAB = 50
NUM_ANSWERS = 3
MAX_POS = 10000          # maximum_position_encoding in the reference module
BATCH = 2
SEQ = 8
BSEQ = BATCH * SEQ                              # rows of the activation slab
TAB_ROWS = ((VOCAB + SEQ + 7) // 8) * 8         # word rows + pos rows, 8-padded
PAD_OUT = 128                                   # lane-dense padded logits width
OUT_ROWS = 8                                    # sublane-dense padded logits rows


# ----------------------------- shared math ---------------------------------
def _layernorm_kernel(x, g, b, eps):
    # E[x^2] - E[x]^2 (independent reductions), clamped against cancellation
    mu = jnp.mean(x, axis=-1, keepdims=True)
    ms = jnp.mean(x * x, axis=-1, keepdims=True)
    var = jnp.maximum(ms - mu * mu, 0.0)
    return (x - mu) * jax.lax.rsqrt(var + eps) * g + b


def _layernorm_ref(x, g, b, eps):
    mu = jnp.mean(x, axis=-1, keepdims=True)
    var = jnp.mean((x - mu) ** 2, axis=-1, keepdims=True)
    return (x - mu) * jax.lax.rsqrt(var + eps) * g + b


# ------------------------------- fused kernel --------------------------------
def fused_transformer_kernel(ids_ref, pos1h_ref, tab_ref, eg_ref, eb_ref,
                             hmask_ref, bbias_ref,
                             wq_ref, wk_ref, wvo_ref, bh_ref,
                             ln1g_ref, ln1b_ref,
                             w1_ref, b1_ref, w2_ref, b2_ref,
                             ln2g_ref, ln2b_ref,
                             wd_ref, bd_ref, o_ref):
    # ---- embeddings: word one-hot + constant positional one-hot, one matmul
    ids_col = ids_ref[...]                                          # (BSEQ, 1) i32
    col = jax.lax.broadcasted_iota(jnp.int32, (BSEQ, TAB_ROWS), 1)
    onehot = (col == ids_col).astype(jnp.float32) + pos1h_ref[...]  # (BSEQ, TAB)
    x = jnp.dot(onehot, tab_ref[...], preferred_element_type=jnp.float32)
    x = _layernorm_kernel(x, eg_ref[...], eb_ref[...], 1e-12)       # (BSEQ, D)

    hmask = hmask_ref[...]       # (H*BSEQ, D)    head column mask (const)
    bbias = bbias_ref[...]       # (H*BSEQ, BSEQ) -1e30 on cross-batch pairs

    for l in range(NUM_LAYERS):                   # static unroll over layers
        # projections for the whole slab (W_q pre-scaled by 1/sqrt(d_k))
        q = jnp.dot(x, wq_ref[l], preferred_element_type=jnp.float32)
        k = jnp.dot(x, wk_ref[l], preferred_element_type=jnp.float32)
        # V' = x @ (W_v[:, head h] @ W_h[head h, :])  -- W_h folded at prep time
        vp = [jnp.dot(x, wvo_ref[l, h], preferred_element_type=jnp.float32)
              for h in range(NUM_HEADS)]                             # H x (BSEQ, D)

        # head-stacked, head-masked Q: one scores matmul for all heads & batches
        qstack = jnp.concatenate([q] * NUM_HEADS, axis=0) * hmask    # (H*BSEQ, D)
        scores = jnp.einsum('md,kd->mk', qstack, k,
                            preferred_element_type=jnp.float32) + bbias
        scores = scores - jnp.max(scores, axis=-1, keepdims=True)
        p = jnp.exp(scores)                                          # masked -> 0
        denom = jnp.sum(p, axis=-1, keepdims=True)
        rcp = pl.reciprocal(denom, approx=True)
        rcp = rcp * (2.0 - denom * rcp)            # one Newton step -> ~f32 accuracy
        a = p * rcp                                                  # (H*BSEQ, BSEQ)

        # context: sum over heads, sublane-aligned slices only
        ctx = jnp.dot(a[0:BSEQ, :], vp[0], preferred_element_type=jnp.float32)
        for h in range(1, NUM_HEADS):
            ctx = ctx + jnp.dot(a[h * BSEQ:(h + 1) * BSEQ, :], vp[h],
                                preferred_element_type=jnp.float32)
        attn = ctx + bh_ref[l]                                       # (BSEQ, D)

        out1 = _layernorm_kernel(x + attn, ln1g_ref[l], ln1b_ref[l], 1e-6)

        # "CNN" block: Linear -> ReLU -> Linear, on the whole slab
        ff = jnp.dot(out1, w1_ref[l], preferred_element_type=jnp.float32) + b1_ref[l]
        ff = jnp.maximum(ff, 0.0)
        ff = jnp.dot(ff, w2_ref[l], preferred_element_type=jnp.float32) + b2_ref[l]
        x = _layernorm_kernel(out1 + ff, ln2g_ref[l], ln2b_ref[l], 1e-6)

    # torch.max over the sequence dim: reshape-reduce (no concat of per-batch maxes)
    pooled = jnp.max(x.reshape(BATCH, SEQ, D_MODEL), axis=1)          # (B, D)
    pooled8 = jnp.concatenate([pooled] * (OUT_ROWS // BATCH), axis=0) # (8, D)
    # dense head, lane- and sublane-dense padded store (full unmasked vst)
    o_ref[...] = jnp.dot(pooled8, wd_ref[...],
                         preferred_element_type=jnp.float32) + bd_ref[...]


# ------------------------------ wrappers -------------------------------------
def prepare_fused_params(params):
    """One-time weight prep: fold scale & W_h, stack per-layer weights, build
    the embedding table slab and the constant head / batch masks."""
    scale = 1.0 / np.sqrt(D_K)
    layers = params["layers"]

    # W_vo[l, h] = W_v[:, h*dk:(h+1)*dk] @ W_h[h*dk:(h+1)*dk, :]   (D, D)
    wvo = jnp.stack([
        jnp.stack([lp["wv"][:, h * D_K:(h + 1) * D_K]
                   @ lp["wh"][h * D_K:(h + 1) * D_K, :]
                   for h in range(NUM_HEADS)])
        for lp in layers])

    # [word_embeddings ; pos_embeddings[:SEQ] ; zero padding]
    table = jnp.zeros((TAB_ROWS, D_MODEL), jnp.float32)
    table = table.at[:VOCAB].set(params["word_emb"])
    table = table.at[VOCAB:VOCAB + SEQ].set(params["pos_emb"][:SEQ])

    # constant positional one-hot (row m selects pos row VOCAB + m % SEQ)
    pos1h = np.zeros((BSEQ, TAB_ROWS), np.float32)
    for m in range(BSEQ):
        pos1h[m, VOCAB + (m % SEQ)] = 1.0

    # head column mask for the sublane-stacked Q
    head_mask = np.zeros((NUM_HEADS * BSEQ, D_MODEL), np.float32)
    for h in range(NUM_HEADS):
        head_mask[h * BSEQ:(h + 1) * BSEQ, h * D_K:(h + 1) * D_K] = 1.0

    # additive bias killing cross-batch attention pairs
    batch_bias = np.full((NUM_HEADS * BSEQ, BSEQ), -1e30, np.float32)
    for h in range(NUM_HEADS):
        for m in range(BSEQ):
            b = m // SEQ
            batch_bias[h * BSEQ + m, b * SEQ:(b + 1) * SEQ] = 0.0

    return dict(
        table=table,
        pos1h=jnp.asarray(pos1h),
        head_mask=jnp.asarray(head_mask),
        batch_bias=jnp.asarray(batch_bias),
        emb_g=params["emb_ln_g"], emb_b=params["emb_ln_b"],
        wq=jnp.stack([lp["wq"] * scale for lp in layers]),
        wk=jnp.stack([lp["wk"] for lp in layers]),
        wvo=wvo,
        bh=jnp.stack([lp["bh"] for lp in layers]),
        ln1g=jnp.stack([lp["ln1_g"] for lp in layers]),
        ln1b=jnp.stack([lp["ln1_b"] for lp in layers]),
        w1=jnp.stack([lp["w1"] for lp in layers]),
        b1=jnp.stack([lp["b1"] for lp in layers]),
        w2=jnp.stack([lp["w2"] for lp in layers]),
        b2=jnp.stack([lp["b2"] for lp in layers]),
        ln2g=jnp.stack([lp["ln2_g"] for lp in layers]),
        ln2b=jnp.stack([lp["ln2_b"] for lp in layers]),
        wd_pad=jnp.zeros((D_MODEL, PAD_OUT), jnp.float32)
               .at[:, :NUM_ANSWERS].set(params["dense_w"]),
        bd_pad=jnp.zeros((1, PAD_OUT), jnp.float32)
               .at[:, :NUM_ANSWERS].set(params["dense_b"]),
    )


def transformer_classifier_forward(ids, params, fused=None):
    if fused is None:
        fused = prepare_fused_params(params)
    B, S = ids.shape
    assert B == BATCH and S == SEQ, "kernel is specialized to (BATCH, SEQ)"
    ids_col = ids.reshape(B * S, 1).astype(jnp.int32)

    out_pad = pl.pallas_call(
        fused_transformer_kernel,
        out_shape=jax.ShapeDtypeStruct((OUT_ROWS, PAD_OUT), jnp.float32),
        compiler_params=pltpu.CompilerParams(vmem_limit_bytes=16 * 1024 * 1024),
    )(ids_col, fused["pos1h"], fused["table"], fused["emb_g"], fused["emb_b"],
      fused["head_mask"], fused["batch_bias"],
      fused["wq"], fused["wk"], fused["wvo"], fused["bh"],
      fused["ln1g"], fused["ln1b"],
      fused["w1"], fused["b1"], fused["w2"], fused["b2"],
      fused["ln2g"], fused["ln2b"],
      fused["wd_pad"], fused["bd_pad"])
    return out_pad[:B, :NUM_ANSWERS]


# --------------------------- parameter init ----------------------------------
def init_params(key):
    kw, kd, kb, *klayers = jax.random.split(key, 3 + NUM_LAYERS)

    word_emb = 0.02 * jax.random.normal(kw, (VOCAB, D_MODEL), jnp.float32)
    word_emb = word_emb.at[1].set(0.0)                # padding_idx = 1

    # sinusoidal position embeddings (create_sinusoidal_embeddings)
    pos = np.arange(MAX_POS, dtype=np.float64)[:, None]
    j = np.arange(D_MODEL)[None, :]
    theta = pos / np.power(10000.0, 2 * (j // 2) / D_MODEL)
    pos_emb = np.zeros((MAX_POS, D_MODEL), dtype=np.float32)
    pos_emb[:, 0::2] = np.sin(theta[:, 0::2])
    pos_emb[:, 1::2] = np.cos(theta[:, 1::2])
    pos_emb = jnp.asarray(pos_emb)

    layers = []
    for kl in klayers:
        ks = jax.random.split(kl, 10)
        layers.append(dict(
            wq=0.05 * jax.random.normal(ks[0], (D_MODEL, D_MODEL), jnp.float32),
            wk=0.05 * jax.random.normal(ks[1], (D_MODEL, D_MODEL), jnp.float32),
            wv=0.05 * jax.random.normal(ks[2], (D_MODEL, D_MODEL), jnp.float32),
            wh=0.05 * jax.random.normal(ks[3], (D_MODEL, D_MODEL), jnp.float32),
            bh=0.05 * jax.random.normal(ks[4], (1, D_MODEL), jnp.float32),
            ln1_g=jnp.ones((1, D_MODEL), jnp.float32),
            ln1_b=jnp.zeros((1, D_MODEL), jnp.float32),
            w1=0.05 * jax.random.normal(ks[5], (D_MODEL, CONV_HIDDEN), jnp.float32),
            b1=0.05 * jax.random.normal(ks[6], (1, CONV_HIDDEN), jnp.float32),
            w2=0.05 * jax.random.normal(ks[7], (CONV_HIDDEN, D_MODEL), jnp.float32),
            b2=0.05 * jax.random.normal(ks[8], (1, D_MODEL), jnp.float32),
            ln2_g=jnp.ones((1, D_MODEL), jnp.float32),
            ln2_b=jnp.zeros((1, D_MODEL), jnp.float32),
        ))

    dense_w = 0.05 * jax.random.normal(kd, (D_MODEL, NUM_ANSWERS), jnp.float32)
    dense_b = 0.05 * jax.random.normal(kb, (1, NUM_ANSWERS), jnp.float32)

    return dict(word_emb=word_emb, pos_emb=pos_emb,
                emb_ln_g=jnp.ones((1, D_MODEL), jnp.float32),
                emb_ln_b=jnp.zeros((1, D_MODEL), jnp.float32),
                layers=layers, dense_w=dense_w, dense_b=dense_b)


# ----------------------------- pure-JAX reference ----------------------------
def reference_forward(ids, params):
    we = params["word_emb"][ids]
    pe = params["pos_emb"][: ids.shape[1]]
    x = _layernorm_ref(we + pe[None], params["emb_ln_g"][0], params["emb_ln_b"][0], 1e-12)
    B, S, _ = x.shape
    for lp in params["layers"]:
        q = x @ lp["wq"]
        k = x @ lp["wk"]
        v = x @ lp["wv"]
        qh = q.reshape(B, S, NUM_HEADS, D_K).transpose(0, 2, 1, 3) / np.sqrt(D_K)
        kh = k.reshape(B, S, NUM_HEADS, D_K).transpose(0, 2, 1, 3)
        vh = v.reshape(B, S, NUM_HEADS, D_K).transpose(0, 2, 1, 3)
        a = jax.nn.softmax(qh @ kh.transpose(0, 1, 3, 2), axis=-1)
        h = (a @ vh).transpose(0, 2, 1, 3).reshape(B, S, D_MODEL)
        h = h @ lp["wh"] + lp["bh"][0]
        out1 = _layernorm_ref(x + h, lp["ln1_g"][0], lp["ln1_b"][0], 1e-6)
        ff = jnp.maximum(out1 @ lp["w1"] + lp["b1"][0], 0.0) @ lp["w2"] + lp["b2"][0]
        x = _layernorm_ref(out1 + ff, lp["ln2_g"][0], lp["ln2_b"][0], 1e-6)
    pooled = jnp.max(x, axis=1)
    return pooled @ params["dense_w"] + params["dense_b"][0]


# ----------------------------------- main ------------------------------------
if __name__ == "__main__":
    key = jax.random.PRNGKey(0)
    kp, ki = jax.random.split(key)
    params = init_params(kp)
    ids = jax.random.randint(ki, (BATCH, SEQ), 0, VOCAB, dtype=jnp.int32)

    fused = prepare_fused_params(params)
    out = transformer_classifier_forward(ids, params, fused)
    out = jax.block_until_ready(out)

    ref = reference_forward(ids, params)
    np.testing.assert_allclose(np.asarray(out), np.asarray(ref), rtol=5e-4, atol=5e-4)

    print("KERNEL_OK")
</pallas_src>

<mosaic_0001>
module attributes {stable_mosaic.version = 11 : i64} {
  func.func @fused_transformer_kernel(%arg0: memref<16x1xi32, #tpu.memory_space<vmem>>, %arg1: memref<16x64xf32, #tpu.memory_space<vmem>>, %arg2: memref<64x32xf32, #tpu.memory_space<vmem>>, %arg3: memref<1x32xf32, #tpu.memory_space<vmem>>, %arg4: memref<1x32xf32, #tpu.memory_space<vmem>>, %arg5: memref<64x32xf32, #tpu.memory_space<vmem>>, %arg6: memref<64x16xf32, #tpu.memory_space<vmem>>, %arg7: memref<2x32x32xf32, #tpu.memory_space<vmem>>, %arg8: memref<2x32x32xf32, #tpu.memory_space<vmem>>, %arg9: memref<2x4x32x32xf32, #tpu.memory_space<vmem>>, %arg10: memref<2x1x32xf32, #tpu.memory_space<vmem>>, %arg11: memref<2x1x32xf32, #tpu.memory_space<vmem>>, %arg12: memref<2x1x32xf32, #tpu.memory_space<vmem>>, %arg13: memref<2x32x64xf32, #tpu.memory_space<vmem>>, %arg14: memref<2x1x64xf32, #tpu.memory_space<vmem>>, %arg15: memref<2x64x32xf32, #tpu.memory_space<vmem>>, %arg16: memref<2x1x32xf32, #tpu.memory_space<vmem>>, %arg17: memref<2x1x32xf32, #tpu.memory_space<vmem>>, %arg18: memref<2x1x32xf32, #tpu.memory_space<vmem>>, %arg19: memref<32x128xf32, #tpu.memory_space<vmem>>, %arg20: memref<1x128xf32, #tpu.memory_space<vmem>>, %arg21: memref<8x128xf32, #tpu.memory_space<vmem>>) attributes {dimension_semantics = [], scalar_prefetch = 0 : i64, scratch_operands = 0 : i64, tpu.core_type = #tpu.core_type<tc>} {
    %c0 = arith.constant 0 : index
    %c0_0 = arith.constant 0 : index
    %0 = vector.load %arg0[%c0, %c0_0] : memref<16x1xi32, #tpu.memory_space<vmem>>, vector<16x1xi32>
    %1 = tpu.iota {dimensions = array<i32: 1>} : vector<16x64xi32>
    %2 = vector.broadcast %0 : vector<16x1xi32> to vector<16x64xi32>
    %3 = arith.cmpi eq, %1, %2 : vector<16x64xi32>
    %4 = arith.extui %3 : vector<16x64xi1> to vector<16x64xi32>
    %5 = arith.sitofp %4 : vector<16x64xi32> to vector<16x64xf32>
    %c0_1 = arith.constant 0 : index
    %c0_2 = arith.constant 0 : index
    %6 = vector.load %arg1[%c0_1, %c0_2] : memref<16x64xf32, #tpu.memory_space<vmem>>, vector<16x64xf32>
    %7 = arith.addf %5, %6 : vector<16x64xf32>
    %c0_3 = arith.constant 0 : index
    %c0_4 = arith.constant 0 : index
    %8 = vector.load %arg2[%c0_3, %c0_4] : memref<64x32xf32, #tpu.memory_space<vmem>>, vector<64x32xf32>
    %cst = arith.constant dense<0.000000e+00> : vector<16x32xf32>
    %9 = tpu.matmul %7, %8, %cst {dimension_numbers = #tpu.dot_dimension_numbers<[1], [0], [0], [1], [0, 0, 1, 1], [], []>} : vector<16x64xf32>, vector<64x32xf32>, vector<16x32xf32> -> vector<16x32xf32>
    %c0_5 = arith.constant 0 : index
    %c0_6 = arith.constant 0 : index
    %10 = vector.load %arg3[%c0_5, %c0_6] : memref<1x32xf32, #tpu.memory_space<vmem>>, vector<1x32xf32>
    %c0_7 = arith.constant 0 : index
    %c0_8 = arith.constant 0 : index
    %11 = vector.load %arg4[%c0_7, %c0_8] : memref<1x32xf32, #tpu.memory_space<vmem>>, vector<1x32xf32>
    %cst_9 = arith.constant dense<0.000000e+00> : vector<16xf32>
    %12 = vector.multi_reduction <add>, %9, %cst_9 [1] : vector<16x32xf32> to vector<16xf32>
    %13 = vector.shape_cast %12 : vector<16xf32> to vector<16x1xf32>
    %cst_10 = arith.constant 3.200000e+01 : f32
    %14 = vector.broadcast %cst_10 : f32 to vector<16x1xf32>
    %15 = arith.divf %13, %14 : vector<16x1xf32>
    %16 = arith.mulf %9, %9 : vector<16x32xf32>
    %cst_11 = arith.constant dense<0.000000e+00> : vector<16xf32>
    %17 = vector.multi_reduction <add>, %16, %cst_11 [1] : vector<16x32xf32> to vector<16xf32>
    %18 = vector.shape_cast %17 : vector<16xf32> to vector<16x1xf32>
    %cst_12 = arith.constant 3.200000e+01 : f32
    %19 = vector.broadcast %cst_12 : f32 to vector<16x1xf32>
    %20 = arith.divf %18, %19 : vector<16x1xf32>
    %21 = arith.mulf %15, %15 : vector<16x1xf32>
    %22 = arith.subf %20, %21 : vector<16x1xf32>
    %cst_13 = arith.constant 0.000000e+00 : f32
    %23 = vector.broadcast %cst_13 : f32 to vector<16x1xf32>
    %24 = arith.maximumf %22, %23 : vector<16x1xf32>
    %25 = vector.broadcast %15 : vector<16x1xf32> to vector<16x32xf32>
    %26 = arith.subf %9, %25 : vector<16x32xf32>
    %cst_14 = arith.constant 9.99999996E-13 : f32
    %27 = vector.broadcast %cst_14 : f32 to vector<16x1xf32>
    %28 = arith.addf %24, %27 : vector<16x1xf32>
    %29 = math.rsqrt %28 : vector<16x1xf32>
    %30 = vector.broadcast %29 : vector<16x1xf32> to vector<16x32xf32>
    %31 = arith.mulf %26, %30 : vector<16x32xf32>
    %32 = vector.broadcast %10 : vector<1x32xf32> to vector<16x32xf32>
    %33 = arith.mulf %31, %32 : vector<16x32xf32>
    %34 = vector.broadcast %11 : vector<1x32xf32> to vector<16x32xf32>
    %35 = arith.addf %33, %34 : vector<16x32xf32>
    %c0_15 = arith.constant 0 : index
    %c0_16 = arith.constant 0 : index
    %36 = vector.load %arg5[%c0_15, %c0_16] : memref<64x32xf32, #tpu.memory_space<vmem>>, vector<64x32xf32>
    %c0_17 = arith.constant 0 : index
    %c0_18 = arith.constant 0 : index
    %37 = vector.load %arg6[%c0_17, %c0_18] : memref<64x16xf32, #tpu.memory_space<vmem>>, vector<64x16xf32>
    %c0_19 = arith.constant 0 : index
    %c0_20 = arith.constant 0 : index
    %c0_21 = arith.constant 0 : index
    %38 = vector.load %arg7[%c0_19, %c0_20, %c0_21] : memref<2x32x32xf32, #tpu.memory_space<vmem>>, vector<1x32x32xf32>
    %39 = vector.shape_cast %38 : vector<1x32x32xf32> to vector<32x32xf32>
    %cst_22 = arith.constant dense<0.000000e+00> : vector<16x32xf32>
    %40 = tpu.matmul %35, %39, %cst_22 {dimension_numbers = #tpu.dot_dimension_numbers<[1], [0], [0], [1], [0, 0, 1, 1], [], []>} : vector<16x32xf32>, vector<32x32xf32>, vector<16x32xf32> -> vector<16x32xf32>
    %c0_23 = arith.constant 0 : index
    %c0_24 = arith.constant 0 : index
    %c0_25 = arith.constant 0 : index
    %41 = vector.load %arg8[%c0_23, %c0_24, %c0_25] : memref<2x32x32xf32, #tpu.memory_space<vmem>>, vector<1x32x32xf32>
    %42 = vector.shape_cast %41 : vector<1x32x32xf32> to vector<32x32xf32>
    %cst_26 = arith.constant dense<0.000000e+00> : vector<16x32xf32>
    %43 = tpu.matmul %35, %42, %cst_26 {dimension_numbers = #tpu.dot_dimension_numbers<[1], [0], [0], [1], [0, 0, 1, 1], [], []>} : vector<16x32xf32>, vector<32x32xf32>, vector<16x32xf32> -> vector<16x32xf32>
    %c0_27 = arith.constant 0 : index
    %c0_28 = arith.constant 0 : index
    %c0_29 = arith.constant 0 : index
    %c0_30 = arith.constant 0 : index
    %44 = vector.load %arg9[%c0_27, %c0_28, %c0_29, %c0_30] : memref<2x4x32x32xf32, #tpu.memory_space<vmem>>, vector<1x1x32x32xf32>
    %45 = vector.shape_cast %44 : vector<1x1x32x32xf32> to vector<32x32xf32>
    %cst_31 = arith.constant dense<0.000000e+00> : vector<16x32xf32>
    %46 = tpu.matmul %35, %45, %cst_31 {dimension_numbers = #tpu.dot_dimension_numbers<[1], [0], [0], [1], [0, 0, 1, 1], [], []>} : vector<16x32xf32>, vector<32x32xf32>, vector<16x32xf32> -> vector<16x32xf32>
    %c0_32 = arith.constant 0 : index
    %c1 = arith.constant 1 : index
    %c0_33 = arith.constant 0 : index
    %c0_34 = arith.constant 0 : index
    %47 = vector.load %arg9[%c0_32, %c1, %c0_33, %c0_34] : memref<2x4x32x32xf32, #tpu.memory_space<vmem>>, vector<1x1x32x32xf32>
    %48 = vector.shape_cast %47 : vector<1x1x32x32xf32> to vector<32x32xf32>
    %cst_35 = arith.constant dense<0.000000e+00> : vector<16x32xf32>
    %49 = tpu.matmul %35, %48, %cst_35 {dimension_numbers = #tpu.dot_dimension_numbers<[1], [0], [0], [1], [0, 0, 1, 1], [], []>} : vector<16x32xf32>, vector<32x32xf32>, vector<16x32xf32> -> vector<16x32xf32>
    %c0_36 = arith.constant 0 : index
    %c2 = arith.constant 2 : index
    %c0_37 = arith.constant 0 : index
    %c0_38 = arith.constant 0 : index
    %50 = vector.load %arg9[%c0_36, %c2, %c0_37, %c0_38] : memref<2x4x32x32xf32, #tpu.memory_space<vmem>>, vector<1x1x32x32xf32>
    %51 = vector.shape_cast %50 : vector<1x1x32x32xf32> to vector<32x32xf32>
    %cst_39 = arith.constant dense<0.000000e+00> : vector<16x32xf32>
    %52 = tpu.matmul %35, %51, %cst_39 {dimension_numbers = #tpu.dot_dimension_numbers<[1], [0], [0], [1], [0, 0, 1, 1], [], []>} : vector<16x32xf32>, vector<32x32xf32>, vector<16x32xf32> -> vector<16x32xf32>
    %c0_40 = arith.constant 0 : index
    %c3 = arith.constant 3 : index
    %c0_41 = arith.constant 0 : index
    %c0_42 = arith.constant 0 : index
    %53 = vector.load %arg9[%c0_40, %c3, %c0_41, %c0_42] : memref<2x4x32x32xf32, #tpu.memory_space<vmem>>, vector<1x1x32x32xf32>
    %54 = vector.shape_cast %53 : vector<1x1x32x32xf32> to vector<32x32xf32>
    %cst_43 = arith.constant dense<0.000000e+00> : vector<16x32xf32>
    %55 = tpu.matmul %35, %54, %cst_43 {dimension_numbers = #tpu.dot_dimension_numbers<[1], [0], [0], [1], [0, 0, 1, 1], [], []>} : vector<16x32xf32>, vector<32x32xf32>, vector<16x32xf32> -> vector<16x32xf32>
    %56 = tpu.concatenate %40, %40, %40, %40 in 0 : vector<16x32xf32>, vector<16x32xf32>, vector<16x32xf32>, vector<16x32xf32> -> vector<64x32xf32>
    %57 = arith.mulf %56, %36 : vector<64x32xf32>
    "tpu.trace_start"() <{level = 10 : i32, message = "md,kd->mk"}> : () -> ()
    %cst_44 = arith.constant dense<0.000000e+00> : vector<64x16xf32>
    %58 = tpu.matmul %57, %43, %cst_44 {dimension_numbers = #tpu.dot_dimension_numbers<[1], [1], [0], [0], [0, 0, 1, 0], [], []>} : vector<64x32xf32>, vector<16x32xf32>, vector<64x16xf32> -> vector<64x16xf32>
    "tpu.trace_stop"() : () -> ()
    %59 = arith.addf %58, %37 : vector<64x16xf32>
    %cst_45 = arith.constant dense<0xFF800000> : vector<64xf32>
    %60 = vector.multi_reduction <maximumf>, %59, %cst_45 [1] : vector<64x16xf32> to vector<64xf32>
    %61 = vector.shape_cast %60 : vector<64xf32> to vector<64x1xf32>
    %62 = vector.broadcast %61 : vector<64x1xf32> to vector<64x16xf32>
    %63 = arith.subf %59, %62 : vector<64x16xf32>
    %64 = math.exp %63 : vector<64x16xf32>
    %cst_46 = arith.constant dense<0.000000e+00> : vector<64xf32>
    %65 = vector.multi_reduction <add>, %64, %cst_46 [1] : vector<64x16xf32> to vector<64xf32>
    %66 = vector.shape_cast %65 : vector<64xf32> to vector<64x1xf32>
    %67 = tpu.reciprocal %66 {approx = true} : vector<64x1xf32> -> vector<64x1xf32>
    %68 = arith.mulf %66, %67 : vector<64x1xf32>
    %cst_47 = arith.constant 2.000000e+00 : f32
    %69 = vector.broadcast %cst_47 : f32 to vector<64x1xf32>
    %70 = arith.subf %69, %68 : vector<64x1xf32>
    %71 = arith.mulf %67, %70 : vector<64x1xf32>
    %72 = vector.broadcast %71 : vector<64x1xf32> to vector<64x16xf32>
    %73 = arith.mulf %64, %72 : vector<64x16xf32>
    %74 = vector.extract_strided_slice %73 {offsets = [0, 0], sizes = [16, 16], strides = [1, 1]} : vector<64x16xf32> to vector<16x16xf32>
    %cst_48 = arith.constant dense<0.000000e+00> : vector<16x32xf32>
    %75 = tpu.matmul %74, %46, %cst_48 {dimension_numbers = #tpu.dot_dimension_numbers<[1], [0], [0], [1], [0, 0, 1, 1], [], []>} : vector<16x16xf32>, vector<16x32xf32>, vector<16x32xf32> -> vector<16x32xf32>
    %76 = vector.extract_strided_slice %73 {offsets = [16, 0], sizes = [16, 16], strides = [1, 1]} : vector<64x16xf32> to vector<16x16xf32>
    %cst_49 = arith.constant dense<0.000000e+00> : vector<16x32xf32>
    %77 = tpu.matmul %76, %49, %cst_49 {dimension_numbers = #tpu.dot_dimension_numbers<[1], [0], [0], [1], [0, 0, 1, 1], [], []>} : vector<16x16xf32>, vector<16x32xf32>, vector<16x32xf32> -> vector<16x32xf32>
    %78 = arith.addf %75, %77 : vector<16x32xf32>
    %79 = vector.extract_strided_slice %73 {offsets = [32, 0], sizes = [16, 16], strides = [1, 1]} : vector<64x16xf32> to vector<16x16xf32>
    %cst_50 = arith.constant dense<0.000000e+00> : vector<16x32xf32>
    %80 = tpu.matmul %79, %52, %cst_50 {dimension_numbers = #tpu.dot_dimension_numbers<[1], [0], [0], [1], [0, 0, 1, 1], [], []>} : vector<16x16xf32>, vector<16x32xf32>, vector<16x32xf32> -> vector<16x32xf32>
    %81 = arith.addf %78, %80 : vector<16x32xf32>
    %82 = vector.extract_strided_slice %73 {offsets = [48, 0], sizes = [16, 16], strides = [1, 1]} : vector<64x16xf32> to vector<16x16xf32>
    %cst_51 = arith.constant dense<0.000000e+00> : vector<16x32xf32>
    %83 = tpu.matmul %82, %55, %cst_51 {dimension_numbers = #tpu.dot_dimension_numbers<[1], [0], [0], [1], [0, 0, 1, 1], [], []>} : vector<16x16xf32>, vector<16x32xf32>, vector<16x32xf32> -> vector<16x32xf32>
    %84 = arith.addf %81, %83 : vector<16x32xf32>
    %c0_52 = arith.constant 0 : index
    %c0_53 = arith.constant 0 : index
    %c0_54 = arith.constant 0 : index
    %85 = vector.load %arg10[%c0_52, %c0_53, %c0_54] : memref<2x1x32xf32, #tpu.memory_space<vmem>>, vector<1x1x32xf32>
    %86 = vector.shape_cast %85 : vector<1x1x32xf32> to vector<1x32xf32>
    %87 = vector.broadcast %86 : vector<1x32xf32> to vector<16x32xf32>
    %88 = arith.addf %84, %87 : vector<16x32xf32>
    %89 = arith.addf %35, %88 : vector<16x32xf32>
    %c0_55 = arith.constant 0 : index
    %c0_56 = arith.constant 0 : index
    %c0_57 = arith.constant 0 : index
    %90 = vector.load %arg11[%c0_55, %c0_56, %c0_57] : memref<2x1x32xf32, #tpu.memory_space<vmem>>, vector<1x1x32xf32>
    %91 = vector.shape_cast %90 : vector<1x1x32xf32> to vector<1x32xf32>
    %c0_58 = arith.constant 0 : index
    %c0_59 = arith.constant 0 : index
    %c0_60 = arith.constant 0 : index
    %92 = vector.load %arg12[%c0_58, %c0_59, %c0_60] : memref<2x1x32xf32, #tpu.memory_space<vmem>>, vector<1x1x32xf32>
    %93 = vector.shape_cast %92 : vector<1x1x32xf32> to vector<1x32xf32>
    %cst_61 = arith.constant dense<0.000000e+00> : vector<16xf32>
    %94 = vector.multi_reduction <add>, %89, %cst_61 [1] : vector<16x32xf32> to vector<16xf32>
    %95 = vector.shape_cast %94 : vector<16xf32> to vector<16x1xf32>
    %cst_62 = arith.constant 3.200000e+01 : f32
    %96 = vector.broadcast %cst_62 : f32 to vector<16x1xf32>
    %97 = arith.divf %95, %96 : vector<16x1xf32>
    %98 = arith.mulf %89, %89 : vector<16x32xf32>
    %cst_63 = arith.constant dense<0.000000e+00> : vector<16xf32>
    %99 = vector.multi_reduction <add>, %98, %cst_63 [1] : vector<16x32xf32> to vector<16xf32>
    %100 = vector.shape_cast %99 : vector<16xf32> to vector<16x1xf32>
    %cst_64 = arith.constant 3.200000e+01 : f32
    %101 = vector.broadcast %cst_64 : f32 to vector<16x1xf32>
    %102 = arith.divf %100, %101 : vector<16x1xf32>
    %103 = arith.mulf %97, %97 : vector<16x1xf32>
    %104 = arith.subf %102, %103 : vector<16x1xf32>
    %cst_65 = arith.constant 0.000000e+00 : f32
    %105 = vector.broadcast %cst_65 : f32 to vector<16x1xf32>
    %106 = arith.maximumf %104, %105 : vector<16x1xf32>
    %107 = vector.broadcast %97 : vector<16x1xf32> to vector<16x32xf32>
    %108 = arith.subf %89, %107 : vector<16x32xf32>
    %cst_66 = arith.constant 9.99999997E-7 : f32
    %109 = vector.broadcast %cst_66 : f32 to vector<16x1xf32>
    %110 = arith.addf %106, %109 : vector<16x1xf32>
    %111 = math.rsqrt %110 : vector<16x1xf32>
    %112 = vector.broadcast %111 : vector<16x1xf32> to vector<16x32xf32>
    %113 = arith.mulf %108, %112 : vector<16x32xf32>
    %114 = vector.broadcast %91 : vector<1x32xf32> to vector<16x32xf32>
    %115 = arith.mulf %113, %114 : vector<16x32xf32>
    %116 = vector.broadcast %93 : vector<1x32xf32> to vector<16x32xf32>
    %117 = arith.addf %115, %116 : vector<16x32xf32>
    %c0_67 = arith.constant 0 : index
    %c0_68 = arith.constant 0 : index
    %c0_69 = arith.constant 0 : index
    %118 = vector.load %arg13[%c0_67, %c0_68, %c0_69] : memref<2x32x64xf32, #tpu.memory_space<vmem>>, vector<1x32x64xf32>
    %119 = vector.shape_cast %118 : vector<1x32x64xf32> to vector<32x64xf32>
    %cst_70 = arith.constant dense<0.000000e+00> : vector<16x64xf32>
    %120 = tpu.matmul %117, %119, %cst_70 {dimension_numbers = #tpu.dot_dimension_numbers<[1], [0], [0], [1], [0, 0, 1, 1], [], []>} : vector<16x32xf32>, vector<32x64xf32>, vector<16x64xf32> -> vector<16x64xf32>
    %c0_71 = arith.constant 0 : index
    %c0_72 = arith.constant 0 : index
    %c0_73 = arith.constant 0 : index
    %121 = vector.load %arg14[%c0_71, %c0_72, %c0_73] : memref<2x1x64xf32, #tpu.memory_space<vmem>>, vector<1x1x64xf32>
    %122 = vector.shape_cast %121 : vector<1x1x64xf32> to vector<1x64xf32>
    %123 = vector.broadcast %122 : vector<1x64xf32> to vector<16x64xf32>
    %124 = arith.addf %120, %123 : vector<16x64xf32>
    %cst_74 = arith.constant 0.000000e+00 : f32
    %125 = vector.broadcast %cst_74 : f32 to vector<16x64xf32>
    %126 = arith.maximumf %124, %125 : vector<16x64xf32>
    %c0_75 = arith.constant 0 : index
    %c0_76 = arith.constant 0 : index
    %c0_77 = arith.constant 0 : index
    %127 = vector.load %arg15[%c0_75, %c0_76, %c0_77] : memref<2x64x32xf32, #tpu.memory_space<vmem>>, vector<1x64x32xf32>
    %128 = vector.shape_cast %127 : vector<1x64x32xf32> to vector<64x32xf32>
    %cst_78 = arith.constant dense<0.000000e+00> : vector<16x32xf32>
    %129 = tpu.matmul %126, %128, %cst_78 {dimension_numbers = #tpu.dot_dimension_numbers<[1], [0], [0], [1], [0, 0, 1, 1], [], []>} : vector<16x64xf32>, vector<64x32xf32>, vector<16x32xf32> -> vector<16x32xf32>
    %c0_79 = arith.constant 0 : index
    %c0_80 = arith.constant 0 : index
    %c0_81 = arith.constant 0 : index
    %130 = vector.load %arg16[%c0_79, %c0_80, %c0_81] : memref<2x1x32xf32, #tpu.memory_space<vmem>>, vector<1x1x32xf32>
    %131 = vector.shape_cast %130 : vector<1x1x32xf32> to vector<1x32xf32>
    %132 = vector.broadcast %131 : vector<1x32xf32> to vector<16x32xf32>
    %133 = arith.addf %129, %132 : vector<16x32xf32>
    %134 = arith.addf %117, %133 : vector<16x32xf32>
    %c0_82 = arith.constant 0 : index
    %c0_83 = arith.constant 0 : index
    %c0_84 = arith.constant 0 : index
    %135 = vector.load %arg17[%c0_82, %c0_83, %c0_84] : memref<2x1x32xf32, #tpu.memory_space<vmem>>, vector<1x1x32xf32>
    %136 = vector.shape_cast %135 : vector<1x1x32xf32> to vector<1x32xf32>
    %c0_85 = arith.constant 0 : index
    %c0_86 = arith.constant 0 : index
    %c0_87 = arith.constant 0 : index
    %137 = vector.load %arg18[%c0_85, %c0_86, %c0_87] : memref<2x1x32xf32, #tpu.memory_space<vmem>>, vector<1x1x32xf32>
    %138 = vector.shape_cast %137 : vector<1x1x32xf32> to vector<1x32xf32>
    %cst_88 = arith.constant dense<0.000000e+00> : vector<16xf32>
    %139 = vector.multi_reduction <add>, %134, %cst_88 [1] : vector<16x32xf32> to vector<16xf32>
    %140 = vector.shape_cast %139 : vector<16xf32> to vector<16x1xf32>
    %cst_89 = arith.constant 3.200000e+01 : f32
    %141 = vector.broadcast %cst_89 : f32 to vector<16x1xf32>
    %142 = arith.divf %140, %141 : vector<16x1xf32>
    %143 = arith.mulf %134, %134 : vector<16x32xf32>
    %cst_90 = arith.constant dense<0.000000e+00> : vector<16xf32>
    %144 = vector.multi_reduction <add>, %143, %cst_90 [1] : vector<16x32xf32> to vector<16xf32>
    %145 = vector.shape_cast %144 : vector<16xf32> to vector<16x1xf32>
    %cst_91 = arith.constant 3.200000e+01 : f32
    %146 = vector.broadcast %cst_91 : f32 to vector<16x1xf32>
    %147 = arith.divf %145, %146 : vector<16x1xf32>
    %148 = arith.mulf %142, %142 : vector<16x1xf32>
    %149 = arith.subf %147, %148 : vector<16x1xf32>
    %cst_92 = arith.constant 0.000000e+00 : f32
    %150 = vector.broadcast %cst_92 : f32 to vector<16x1xf32>
    %151 = arith.maximumf %149, %150 : vector<16x1xf32>
    %152 = vector.broadcast %142 : vector<16x1xf32> to vector<16x32xf32>
    %153 = arith.subf %134, %152 : vector<16x32xf32>
    %cst_93 = arith.constant 9.99999997E-7 : f32
    %154 = vector.broadcast %cst_93 : f32 to vector<16x1xf32>
    %155 = arith.addf %151, %154 : vector<16x1xf32>
    %156 = math.rsqrt %155 : vector<16x1xf32>
    %157 = vector.broadcast %156 : vector<16x1xf32> to vector<16x32xf32>
    %158 = arith.mulf %153, %157 : vector<16x32xf32>
    %159 = vector.broadcast %136 : vector<1x32xf32> to vector<16x32xf32>
    %160 = arith.mulf %158, %159 : vector<16x32xf32>
    %161 = vector.broadcast %138 : vector<1x32xf32> to vector<16x32xf32>
    %162 = arith.addf %160, %161 : vector<16x32xf32>
    %c1_94 = arith.constant 1 : index
    %c0_95 = arith.constant 0 : index
    %c0_96 = arith.constant 0 : index
    %163 = vector.load %arg7[%c1_94, %c0_95, %c0_96] : memref<2x32x32xf32, #tpu.memory_space<vmem>>, vector<1x32x32xf32>
    %164 = vector.shape_cast %163 : vector<1x32x32xf32> to vector<32x32xf32>
    %cst_97 = arith.constant dense<0.000000e+00> : vector<16x32xf32>
    %165 = tpu.matmul %162, %164, %cst_97 {dimension_numbers = #tpu.dot_dimension_numbers<[1], [0], [0], [1], [0, 0, 1, 1], [], []>} : vector<16x32xf32>, vector<32x32xf32>, vector<16x32xf32> -> vector<16x32xf32>
    %c1_98 = arith.constant 1 : index
    %c0_99 = arith.constant 0 : index
    %c0_100 = arith.constant 0 : index
    %166 = vector.load %arg8[%c1_98, %c0_99, %c0_100] : memref<2x32x32xf32, #tpu.memory_space<vmem>>, vector<1x32x32xf32>
    %167 = vector.shape_cast %166 : vector<1x32x32xf32> to vector<32x32xf32>
    %cst_101 = arith.constant dense<0.000000e+00> : vector<16x32xf32>
    %168 = tpu.matmul %162, %167, %cst_101 {dimension_numbers = #tpu.dot_dimension_numbers<[1], [0], [0], [1], [0, 0, 1, 1], [], []>} : vector<16x32xf32>, vector<32x32xf32>, vector<16x32xf32> -> vector<16x32xf32>
    %c1_102 = arith.constant 1 : index
    %c0_103 = arith.constant 0 : index
    %c0_104 = arith.constant 0 : index
    %c0_105 = arith.constant 0 : index
    %169 = vector.load %arg9[%c1_102, %c0_103, %c0_104, %c0_105] : memref<2x4x32x32xf32, #tpu.memory_space<vmem>>, vector<1x1x32x32xf32>
    %170 = vector.shape_cast %169 : vector<1x1x32x32xf32> to vector<32x32xf32>
    %cst_106 = arith.constant dense<0.000000e+00> : vector<16x32xf32>
    %171 = tpu.matmul %162, %170, %cst_106 {dimension_numbers = #tpu.dot_dimension_numbers<[1], [0], [0], [1], [0, 0, 1, 1], [], []>} : vector<16x32xf32>, vector<32x32xf32>, vector<16x32xf32> -> vector<16x32xf32>
    %c1_107 = arith.constant 1 : index
    %c1_108 = arith.constant 1 : index
    %c0_109 = arith.constant 0 : index
    %c0_110 = arith.constant 0 : index
    %172 = vector.load %arg9[%c1_107, %c1_108, %c0_109, %c0_110] : memref<2x4x32x32xf32, #tpu.memory_space<vmem>>, vector<1x1x32x32xf32>
    %173 = vector.shape_cast %172 : vector<1x1x32x32xf32> to vector<32x32xf32>
    %cst_111 = arith.constant dense<0.000000e+00> : vector<16x32xf32>
    %174 = tpu.matmul %162, %173, %cst_111 {dimension_numbers = #tpu.dot_dimension_numbers<[1], [0], [0], [1], [0, 0, 1, 1], [], []>} : vector<16x32xf32>, vector<32x32xf32>, vector<16x32xf32> -> vector<16x32xf32>
    %c1_112 = arith.constant 1 : index
    %c2_113 = arith.constant 2 : index
    %c0_114 = arith.constant 0 : index
    %c0_115 = arith.constant 0 : index
    %175 = vector.load %arg9[%c1_112, %c2_113, %c0_114, %c0_115] : memref<2x4x32x32xf32, #tpu.memory_space<vmem>>, vector<1x1x32x32xf32>
    %176 = vector.shape_cast %175 : vector<1x1x32x32xf32> to vector<32x32xf32>
    %cst_116 = arith.constant dense<0.000000e+00> : vector<16x32xf32>
    %177 = tpu.matmul %162, %176, %cst_116 {dimension_numbers = #tpu.dot_dimension_numbers<[1], [0], [0], [1], [0, 0, 1, 1], [], []>} : vector<16x32xf32>, vector<32x32xf32>, vector<16x32xf32> -> vector<16x32xf32>
    %c1_117 = arith.constant 1 : index
    %c3_118 = arith.constant 3 : index
    %c0_119 = arith.constant 0 : index
    %c0_120 = arith.constant 0 : index
    %178 = vector.load %arg9[%c1_117, %c3_118, %c0_119, %c0_120] : memref<2x4x32x32xf32, #tpu.memory_space<vmem>>, vector<1x1x32x32xf32>
    %179 = vector.shape_cast %178 : vector<1x1x32x32xf32> to vector<32x32xf32>
    %cst_121 = arith.constant dense<0.000000e+00> : vector<16x32xf32>
    %180 = tpu.matmul %162, %179, %cst_121 {dimension_numbers = #tpu.dot_dimension_numbers<[1], [0], [0], [1], [0, 0, 1, 1], [], []>} : vector<16x32xf32>, vector<32x32xf32>, vector<16x32xf32> -> vector<16x32xf32>
    %181 = tpu.concatenate %165, %165, %165, %165 in 0 : vector<16x32xf32>, vector<16x32xf32>, vector<16x32xf32>, vector<16x32xf32> -> vector<64x32xf32>
    %182 = arith.mulf %181, %36 : vector<64x32xf32>
    "tpu.trace_start"() <{level = 10 : i32, message = "md,kd->mk"}> : () -> ()
    %cst_122 = arith.constant dense<0.000000e+00> : vector<64x16xf32>
    %183 = tpu.matmul %182, %168, %cst_122 {dimension_numbers = #tpu.dot_dimension_numbers<[1], [1], [0], [0], [0, 0, 1, 0], [], []>} : vector<64x32xf32>, vector<16x32xf32>, vector<64x16xf32> -> vector<64x16xf32>
    "tpu.trace_stop"() : () -> ()
    %184 = arith.addf %183, %37 : vector<64x16xf32>
    %cst_123 = arith.constant dense<0xFF800000> : vector<64xf32>
    %185 = vector.multi_reduction <maximumf>, %184, %cst_123 [1] : vector<64x16xf32> to vector<64xf32>
    %186 = vector.shape_cast %185 : vector<64xf32> to vector<64x1xf32>
    %187 = vector.broadcast %186 : vector<64x1xf32> to vector<64x16xf32>
    %188 = arith.subf %184, %187 : vector<64x16xf32>
    %189 = math.exp %188 : vector<64x16xf32>
    %cst_124 = arith.constant dense<0.000000e+00> : vector<64xf32>
    %190 = vector.multi_reduction <add>, %189, %cst_124 [1] : vector<64x16xf32> to vector<64xf32>
    %191 = vector.shape_cast %190 : vector<64xf32> to vector<64x1xf32>
    %192 = tpu.reciprocal %191 {approx = true} : vector<64x1xf32> -> vector<64x1xf32>
    %193 = arith.mulf %191, %192 : vector<64x1xf32>
    %cst_125 = arith.constant 2.000000e+00 : f32
    %194 = vector.broadcast %cst_125 : f32 to vector<64x1xf32>
    %195 = arith.subf %194, %193 : vector<64x1xf32>
    %196 = arith.mulf %192, %195 : vector<64x1xf32>
    %197 = vector.broadcast %196 : vector<64x1xf32> to vector<64x16xf32>
    %198 = arith.mulf %189, %197 : vector<64x16xf32>
    %199 = vector.extract_strided_slice %198 {offsets = [0, 0], sizes = [16, 16], strides = [1, 1]} : vector<64x16xf32> to vector<16x16xf32>
    %cst_126 = arith.constant dense<0.000000e+00> : vector<16x32xf32>
    %200 = tpu.matmul %199, %171, %cst_126 {dimension_numbers = #tpu.dot_dimension_numbers<[1], [0], [0], [1], [0, 0, 1, 1], [], []>} : vector<16x16xf32>, vector<16x32xf32>, vector<16x32xf32> -> vector<16x32xf32>
    %201 = vector.extract_strided_slice %198 {offsets = [16, 0], sizes = [16, 16], strides = [1, 1]} : vector<64x16xf32> to vector<16x16xf32>
    %cst_127 = arith.constant dense<0.000000e+00> : vector<16x32xf32>
    %202 = tpu.matmul %201, %174, %cst_127 {dimension_numbers = #tpu.dot_dimension_numbers<[1], [0], [0], [1], [0, 0, 1, 1], [], []>} : vector<16x16xf32>, vector<16x32xf32>, vector<16x32xf32> -> vector<16x32xf32>
    %203 = arith.addf %200, %202 : vector<16x32xf32>
    %204 = vector.extract_strided_slice %198 {offsets = [32, 0], sizes = [16, 16], strides = [1, 1]} : vector<64x16xf32> to vector<16x16xf32>
    %cst_128 = arith.constant dense<0.000000e+00> : vector<16x32xf32>
    %205 = tpu.matmul %204, %177, %cst_128 {dimension_numbers = #tpu.dot_dimension_numbers<[1], [0], [0], [1], [0, 0, 1, 1], [], []>} : vector<16x16xf32>, vector<16x32xf32>, vector<16x32xf32> -> vector<16x32xf32>
    %206 = arith.addf %203, %205 : vector<16x32xf32>
    %207 = vector.extract_strided_slice %198 {offsets = [48, 0], sizes = [16, 16], strides = [1, 1]} : vector<64x16xf32> to vector<16x16xf32>
    %cst_129 = arith.constant dense<0.000000e+00> : vector<16x32xf32>
    %208 = tpu.matmul %207, %180, %cst_129 {dimension_numbers = #tpu.dot_dimension_numbers<[1], [0], [0], [1], [0, 0, 1, 1], [], []>} : vector<16x16xf32>, vector<16x32xf32>, vector<16x32xf32> -> vector<16x32xf32>
    %209 = arith.addf %206, %208 : vector<16x32xf32>
    %c1_130 = arith.constant 1 : index
    %c0_131 = arith.constant 0 : index
    %c0_132 = arith.constant 0 : index
    %210 = vector.load %arg10[%c1_130, %c0_131, %c0_132] : memref<2x1x32xf32, #tpu.memory_space<vmem>>, vector<1x1x32xf32>
    %211 = vector.shape_cast %210 : vector<1x1x32xf32> to vector<1x32xf32>
    %212 = vector.broadcast %211 : vector<1x32xf32> to vector<16x32xf32>
    %213 = arith.addf %209, %212 : vector<16x32xf32>
    %214 = arith.addf %162, %213 : vector<16x32xf32>
    %c1_133 = arith.constant 1 : index
    %c0_134 = arith.constant 0 : index
    %c0_135 = arith.constant 0 : index
    %215 = vector.load %arg11[%c1_133, %c0_134, %c0_135] : memref<2x1x32xf32, #tpu.memory_space<vmem>>, vector<1x1x32xf32>
    %216 = vector.shape_cast %215 : vector<1x1x32xf32> to vector<1x32xf32>
    %c1_136 = arith.constant 1 : index
    %c0_137 = arith.constant 0 : index
    %c0_138 = arith.constant 0 : index
    %217 = vector.load %arg12[%c1_136, %c0_137, %c0_138] : memref<2x1x32xf32, #tpu.memory_space<vmem>>, vector<1x1x32xf32>
    %218 = vector.shape_cast %217 : vector<1x1x32xf32> to vector<1x32xf32>
    %cst_139 = arith.constant dense<0.000000e+00> : vector<16xf32>
    %219 = vector.multi_reduction <add>, %214, %cst_139 [1] : vector<16x32xf32> to vector<16xf32>
    %220 = vector.shape_cast %219 : vector<16xf32> to vector<16x1xf32>
    %cst_140 = arith.constant 3.200000e+01 : f32
    %221 = vector.broadcast %cst_140 : f32 to vector<16x1xf32>
    %222 = arith.divf %220, %221 : vector<16x1xf32>
    %223 = arith.mulf %214, %214 : vector<16x32xf32>
    %cst_141 = arith.constant dense<0.000000e+00> : vector<16xf32>
    %224 = vector.multi_reduction <add>, %223, %cst_141 [1] : vector<16x32xf32> to vector<16xf32>
    %225 = vector.shape_cast %224 : vector<16xf32> to vector<16x1xf32>
    %cst_142 = arith.constant 3.200000e+01 : f32
    %226 = vector.broadcast %cst_142 : f32 to vector<16x1xf32>
    %227 = arith.divf %225, %226 : vector<16x1xf32>
    %228 = arith.mulf %222, %222 : vector<16x1xf32>
    %229 = arith.subf %227, %228 : vector<16x1xf32>
    %cst_143 = arith.constant 0.000000e+00 : f32
    %230 = vector.broadcast %cst_143 : f32 to vector<16x1xf32>
    %231 = arith.maximumf %229, %230 : vector<16x1xf32>
    %232 = vector.broadcast %222 : vector<16x1xf32> to vector<16x32xf32>
    %233 = arith.subf %214, %232 : vector<16x32xf32>
    %cst_144 = arith.constant 9.99999997E-7 : f32
    %234 = vector.broadcast %cst_144 : f32 to vector<16x1xf32>
    %235 = arith.addf %231, %234 : vector<16x1xf32>
    %236 = math.rsqrt %235 : vector<16x1xf32>
    %237 = vector.broadcast %236 : vector<16x1xf32> to vector<16x32xf32>
    %238 = arith.mulf %233, %237 : vector<16x32xf32>
    %239 = vector.broadcast %216 : vector<1x32xf32> to vector<16x32xf32>
    %240 = arith.mulf %238, %239 : vector<16x32xf32>
    %241 = vector.broadcast %218 : vector<1x32xf32> to vector<16x32xf32>
    %242 = arith.addf %240, %241 : vector<16x32xf32>
    %c1_145 = arith.constant 1 : index
    %c0_146 = arith.constant 0 : index
    %c0_147 = arith.constant 0 : index
    %243 = vector.load %arg13[%c1_145, %c0_146, %c0_147] : memref<2x32x64xf32, #tpu.memory_space<vmem>>, vector<1x32x64xf32>
    %244 = vector.shape_cast %243 : vector<1x32x64xf32> to vector<32x64xf32>
    %cst_148 = arith.constant dense<0.000000e+00> : vector<16x64xf32>
    %245 = tpu.matmul %242, %244, %cst_148 {dimension_numbers = #tpu.dot_dimension_numbers<[1], [0], [0], [1], [0, 0, 1, 1], [], []>} : vector<16x32xf32>, vector<32x64xf32>, vector<16x64xf32> -> vector<16x64xf32>
    %c1_149 = arith.constant 1 : index
    %c0_150 = arith.constant 0 : index
    %c0_151 = arith.constant 0 : index
    %246 = vector.load %arg14[%c1_149, %c0_150, %c0_151] : memref<2x1x64xf32, #tpu.memory_space<vmem>>, vector<1x1x64xf32>
    %247 = vector.shape_cast %246 : vector<1x1x64xf32> to vector<1x64xf32>
    %248 = vector.broadcast %247 : vector<1x64xf32> to vector<16x64xf32>
    %249 = arith.addf %245, %248 : vector<16x64xf32>
    %cst_152 = arith.constant 0.000000e+00 : f32
    %250 = vector.broadcast %cst_152 : f32 to vector<16x64xf32>
    %251 = arith.maximumf %249, %250 : vector<16x64xf32>
    %c1_153 = arith.constant 1 : index
    %c0_154 = arith.constant 0 : index
    %c0_155 = arith.constant 0 : index
    %252 = vector.load %arg15[%c1_153, %c0_154, %c0_155] : memref<2x64x32xf32, #tpu.memory_space<vmem>>, vector<1x64x32xf32>
    %253 = vector.shape_cast %252 : vector<1x64x32xf32> to vector<64x32xf32>
    %cst_156 = arith.constant dense<0.000000e+00> : vector<16x32xf32>
    %254 = tpu.matmul %251, %253, %cst_156 {dimension_numbers = #tpu.dot_dimension_numbers<[1], [0], [0], [1], [0, 0, 1, 1], [], []>} : vector<16x64xf32>, vector<64x32xf32>, vector<16x32xf32> -> vector<16x32xf32>
    %c1_157 = arith.constant 1 : index
    %c0_158 = arith.constant 0 : index
    %c0_159 = arith.constant 0 : index
    %255 = vector.load %arg16[%c1_157, %c0_158, %c0_159] : memref<2x1x32xf32, #tpu.memory_space<vmem>>, vector<1x1x32xf32>
    %256 = vector.shape_cast %255 : vector<1x1x32xf32> to vector<1x32xf32>
    %257 = vector.broadcast %256 : vector<1x32xf32> to vector<16x32xf32>
    %258 = arith.addf %254, %257 : vector<16x32xf32>
    %259 = arith.addf %242, %258 : vector<16x32xf32>
    %c1_160 = arith.constant 1 : index
    %c0_161 = arith.constant 0 : index
    %c0_162 = arith.constant 0 : index
    %260 = vector.load %arg17[%c1_160, %c0_161, %c0_162] : memref<2x1x32xf32, #tpu.memory_space<vmem>>, vector<1x1x32xf32>
    %261 = vector.shape_cast %260 : vector<1x1x32xf32> to vector<1x32xf32>
    %c1_163 = arith.constant 1 : index
    %c0_164 = arith.constant 0 : index
    %c0_165 = arith.constant 0 : index
    %262 = vector.load %arg18[%c1_163, %c0_164, %c0_165] : memref<2x1x32xf32, #tpu.memory_space<vmem>>, vector<1x1x32xf32>
    %263 = vector.shape_cast %262 : vector<1x1x32xf32> to vector<1x32xf32>
    %cst_166 = arith.constant dense<0.000000e+00> : vector<16xf32>
    %264 = vector.multi_reduction <add>, %259, %cst_166 [1] : vector<16x32xf32> to vector<16xf32>
    %265 = vector.shape_cast %264 : vector<16xf32> to vector<16x1xf32>
    %cst_167 = arith.constant 3.200000e+01 : f32
    %266 = vector.broadcast %cst_167 : f32 to vector<16x1xf32>
    %267 = arith.divf %265, %266 : vector<16x1xf32>
    %268 = arith.mulf %259, %259 : vector<16x32xf32>
    %cst_168 = arith.constant dense<0.000000e+00> : vector<16xf32>
    %269 = vector.multi_reduction <add>, %268, %cst_168 [1] : vector<16x32xf32> to vector<16xf32>
    %270 = vector.shape_cast %269 : vector<16xf32> to vector<16x1xf32>
    %cst_169 = arith.constant 3.200000e+01 : f32
    %271 = vector.broadcast %cst_169 : f32 to vector<16x1xf32>
    %272 = arith.divf %270, %271 : vector<16x1xf32>
    %273 = arith.mulf %267, %267 : vector<16x1xf32>
    %274 = arith.subf %272, %273 : vector<16x1xf32>
    %cst_170 = arith.constant 0.000000e+00 : f32
    %275 = vector.broadcast %cst_170 : f32 to vector<16x1xf32>
    %276 = arith.maximumf %274, %275 : vector<16x1xf32>
    %277 = vector.broadcast %267 : vector<16x1xf32> to vector<16x32xf32>
    %278 = arith.subf %259, %277 : vector<16x32xf32>
    %cst_171 = arith.constant 9.99999997E-7 : f32
    %279 = vector.broadcast %cst_171 : f32 to vector<16x1xf32>
    %280 = arith.addf %276, %279 : vector<16x1xf32>
    %281 = math.rsqrt %280 : vector<16x1xf32>
    %282 = vector.broadcast %281 : vector<16x1xf32> to vector<16x32xf32>
    %283 = arith.mulf %278, %282 : vector<16x32xf32>
    %284 = vector.broadcast %261 : vector<1x32xf32> to vector<16x32xf32>
    %285 = arith.mulf %283, %284 : vector<16x32xf32>
    %286 = vector.broadcast %263 : vector<1x32xf32> to vector<16x32xf32>
    %287 = arith.addf %285, %286 : vector<16x32xf32>
    %288 = vector.shape_cast %287 : vector<16x32xf32> to vector<2x8x32xf32>
    %cst_172 = arith.constant dense<0xFF800000> : vector<2x32xf32>
    %289 = vector.multi_reduction <maximumf>, %288, %cst_172 [1] : vector<2x8x32xf32> to vector<2x32xf32>
    %290 = tpu.concatenate %289, %289, %289, %289 in 0 : vector<2x32xf32>, vector<2x32xf32>, vector<2x32xf32>, vector<2x32xf32> -> vector<8x32xf32>
    %c0_173 = arith.constant 0 : index
    %c0_174 = arith.constant 0 : index
    %291 = vector.load %arg19[%c0_173, %c0_174] : memref<32x128xf32, #tpu.memory_space<vmem>>, vector<32x128xf32>
    %cst_175 = arith.constant dense<0.000000e+00> : vector<8x128xf32>
    %292 = tpu.matmul %290, %291, %cst_175 {dimension_numbers = #tpu.dot_dimension_numbers<[1], [0], [0], [1], [0, 0, 1, 1], [], []>} : vector<8x32xf32>, vector<32x128xf32>, vector<8x128xf32> -> vector<8x128xf32>
    %c0_176 = arith.constant 0 : index
    %c0_177 = arith.constant 0 : index
    %293 = vector.load %arg20[%c0_176, %c0_177] : memref<1x128xf32, #tpu.memory_space<vmem>>, vector<1x128xf32>
    %294 = vector.broadcast %293 : vector<1x128xf32> to vector<8x128xf32>
    %295 = arith.addf %292, %294 : vector<8x128xf32>
    %c0_178 = arith.constant 0 : index
    %c0_179 = arith.constant 0 : index
    %296 = vector.load %arg21[%c0_178, %c0_179] : memref<8x128xf32, #tpu.memory_space<vmem>>, vector<8x128xf32>
    tpu.vector_store %arg21[%c0_178, %c0_179], %295 {strides = array<i32>} : memref<8x128xf32, #tpu.memory_space<vmem>>, vector<8x128xf32>,
    return
  }
}

</mosaic_0001>

<llo_original>
// kernel: tpu_custom_call.1
$region0: #{tpu_custom_call.1}
  #allocation0 [shape = 'u32[]', space=smem, size = 0x4, offset = 0x4, fixed_abs, tag = 'smem constant byte address 0x4 - core index']
  #allocation1 [shape = 'u32[72,128]{1,0:T(1,128)}', space=vmem, size = 0x9000, scoped, tag = 'internal scratch']
  %s0 = inlined_call_operand.vmem [shape: s32[16,1], index: 0, kind: input, shape index: {}]
  %s1 = inlined_call_operand.vmem [shape: f32[16,64], index: 1, kind: input, shape index: {}]
  %s2 = inlined_call_operand.vmem [shape: f32[64,32], index: 2, kind: input, shape index: {}]
  %s3 = inlined_call_operand.vmem [shape: f32[1,32], index: 3, kind: input, shape index: {}]
  %s4 = inlined_call_operand.vmem [shape: f32[1,32], index: 4, kind: input, shape index: {}]
  %s5 = inlined_call_operand.vmem [shape: f32[64,32], index: 5, kind: input, shape index: {}]
  %s6 = inlined_call_operand.vmem [shape: f32[64,16], index: 6, kind: input, shape index: {}]
  %s7 = inlined_call_operand.vmem [shape: f32[2,32,32], index: 7, kind: input, shape index: {}]
  %s8 = inlined_call_operand.vmem [shape: f32[2,32,32], index: 8, kind: input, shape index: {}]
  %s9 = inlined_call_operand.hbm [shape: f32[2,4,32,32], index: 9, kind: input, shape index: {}]
  %s10 = inlined_call_operand.vmem [shape: f32[2,1,32], index: 10, kind: input, shape index: {}]
  %s11 = inlined_call_operand.vmem [shape: f32[2,1,32], index: 11, kind: input, shape index: {}]
  %s12 = inlined_call_operand.vmem [shape: f32[2,1,32], index: 12, kind: input, shape index: {}]
  %s13 = inlined_call_operand.vmem [shape: f32[2,32,64], index: 13, kind: input, shape index: {}]
  %s14 = inlined_call_operand.vmem [shape: f32[2,1,64], index: 14, kind: input, shape index: {}]
  %s15 = inlined_call_operand.vmem [shape: f32[2,64,32], index: 15, kind: input, shape index: {}]
  %s16 = inlined_call_operand.vmem [shape: f32[2,1,32], index: 16, kind: input, shape index: {}]
  %s17 = inlined_call_operand.vmem [shape: f32[2,1,32], index: 17, kind: input, shape index: {}]
  %s18 = inlined_call_operand.vmem [shape: f32[2,1,32], index: 18, kind: input, shape index: {}]
  %s19 = inlined_call_operand.vmem [shape: f32[32,128], index: 19, kind: input, shape index: {}]
  %s20 = inlined_call_operand.vmem [shape: f32[1,128], index: 20, kind: input, shape index: {}]
  %s21 = inlined_call_operand.hbm [shape: f32[8,128], index: 21, kind: output, shape index: {}]
  %s22 = sld [smem:[#allocation0]]
  $region98: #{tpu_custom_call.1} parent=0
    _
  %s24 = ssub.s32 1, %s22
  %s25 = scalar_select 0, %s24, %s22
  $region1: #{tpu_custom_call.1} parent=0
    #allocation2 [shape = 'u8[131072]{0}', space=vmem, size = 0x20000, scoped, tag = 'input window, operand 9, single buffered']
    #allocation3 [shape = 's32[1]{0}', space=sflag, size = 0x4, scoped, tag = 'scoped memory for tpu_custom_call.1']
    #allocation4 [shape = 's32[1]{0}', space=sflag, size = 0x4, scoped, tag = 'scoped memory for tpu_custom_call.1']
    #allocation5 [shape = 'u8[4096]{0}', space=vmem, size = 0x1000, scoped, tag = 'output window, operand 0, single buffered']
    %26 = vsyncpa [#allocation3], 0
    %27 = vsyncpa [#allocation4], 0
    // Predicated region
    $region2: #{tpu_custom_call.1} parent=1 // pred_check
      _
    $region3: #{tpu_custom_call.1} parent=1 // pred_check_branch
      %29 = sbr.rel (0) target = $region5
    $region4: #{tpu_custom_call.1} parent=1 // pred_region
      _
    $region5: #{tpu_custom_call.1} parent=1 // pred_fallthru
      _
    // Predicated region
    $region6: #{tpu_custom_call.1} parent=1 // pred_check
      _
    $region7: #{tpu_custom_call.1} parent=1 // pred_check_branch
      %31 = sbr.rel (0) target = $region9
    $region8: #{tpu_custom_call.1} parent=1 // pred_region
      _
    $region9: #{tpu_custom_call.1} parent=1 // pred_fallthru
      _
    // Predicated region
    $region10: #{tpu_custom_call.1} parent=1 // pred_check
      _
    $region11: #{tpu_custom_call.1} parent=1 // pred_check_branch
      %33 = sbr.rel (0) target = $region13
    $region12: #{tpu_custom_call.1} parent=1 // pred_region
      _
    $region13: #{tpu_custom_call.1} parent=1 // pred_fallthru
      _
    // Predicated region
    $region14: #{tpu_custom_call.1} parent=1 // pred_check
      _
    $region15: #{tpu_custom_call.1} parent=1 // pred_check_branch
      %35 = sbr.rel (0) target = $region17
    $region16: #{tpu_custom_call.1} parent=1 // pred_region
      _
    $region17: #{tpu_custom_call.1} parent=1 // pred_fallthru
      _
    // Predicated region
    $region18: #{tpu_custom_call.1} parent=1 // pred_check
      _
    $region19: #{tpu_custom_call.1} parent=1 // pred_check_branch
      %37 = sbr.rel (0) target = $region21
    $region20: #{tpu_custom_call.1} parent=1 // pred_region
      _
    $region21: #{tpu_custom_call.1} parent=1 // pred_fallthru
      _
    // Predicated region
    $region22: #{tpu_custom_call.1} parent=1 // pred_check
      _
    $region23: #{tpu_custom_call.1} parent=1 // pred_check_branch
      %39 = sbr.rel (0) target = $region25
    $region24: #{tpu_custom_call.1} parent=1 // pred_region
      _
    $region25: #{tpu_custom_call.1} parent=1 // pred_fallthru
      _
    // Predicated region
    $region26: #{tpu_custom_call.1} parent=1 // pred_check
      _
    $region27: #{tpu_custom_call.1} parent=1 // pred_check_branch
      %41 = sbr.rel (0) target = $region29
    $region28: #{tpu_custom_call.1} parent=1 // pred_region
      _
    $region29: #{tpu_custom_call.1} parent=1 // pred_fallthru
      _
    // Predicated region
    $region30: #{tpu_custom_call.1} parent=1 // pred_check
      _
    $region31: #{tpu_custom_call.1} parent=1 // pred_check_branch
      %43 = sbr.rel (0) target = $region33
    $region32: #{tpu_custom_call.1} parent=1 // pred_region
      _
    $region33: #{tpu_custom_call.1} parent=1 // pred_fallthru
      _
    // Predicated region
    $region34: #{tpu_custom_call.1} parent=1 // pred_check
      _
    $region35: #{tpu_custom_call.1} parent=1 // pred_check_branch
      %45 = sbr.rel (0) target = $region37
    $region36: #{tpu_custom_call.1} parent=1 // pred_region
      _
    $region37: #{tpu_custom_call.1} parent=1 // pred_fallthru
      _
    // Predicated region
    $region38: #{tpu_custom_call.1} parent=1 // pred_check
      _
    $region39: #{tpu_custom_call.1} parent=1 // pred_check_branch
      %47 = sbr.rel (0) target = $region41
    $region40: #{tpu_custom_call.1} parent=1 // pred_region
      %49 = vsyncadd [#allocation3], 0
      %s50 = sshll.u32 %s9, 4
      %s51 = int_to_ptr.hbm [resolvable:$true] %s50
      %s52 = sshll.u32 [#allocation2], 4
      %s53 = int_to_ptr.vmem [resolvable:$true] %s52
      %58 = dma.hbm_to_vmem [thread:$0]  %s51, 4096, %s53, [#allocation3], 128, 128, 8
    $region41: #{tpu_custom_call.1} parent=1 // pred_fallthru
      _
    // Predicated region
    $region42: #{tpu_custom_call.1} parent=1 // pred_check
      _
    $region43: #{tpu_custom_call.1} parent=1 // pred_check_branch
      %60 = sbr.rel (0) target = $region45
    $region44: #{tpu_custom_call.1} parent=1 // pred_region
      _
    $region45: #{tpu_custom_call.1} parent=1 // pred_fallthru
      _
    // Predicated region
    $region46: #{tpu_custom_call.1} parent=1 // pred_check
      _
    $region47: #{tpu_custom_call.1} parent=1 // pred_check_branch
      %62 = sbr.rel (0) target = $region49
    $region48: #{tpu_custom_call.1} parent=1 // pred_region
      _
    $region49: #{tpu_custom_call.1} parent=1 // pred_fallthru
      _
    // Predicated region
    $region50: #{tpu_custom_call.1} parent=1 // pred_check
      _
    $region51: #{tpu_custom_call.1} parent=1 // pred_check_branch
      %64 = sbr.rel (0) target = $region53
    $region52: #{tpu_custom_call.1} parent=1 // pred_region
      _
    $region53: #{tpu_custom_call.1} parent=1 // pred_fallthru
      _
    // Predicated region
    $region54: #{tpu_custom_call.1} parent=1 // pred_check
      _
    $region55: #{tpu_custom_call.1} parent=1 // pred_check_branch
      %66 = sbr.rel (0) target = $region57
    $region56: #{tpu_custom_call.1} parent=1 // pred_region
      _
    $region57: #{tpu_custom_call.1} parent=1 // pred_fallthru
      _
    // Predicated region
    $region58: #{tpu_custom_call.1} parent=1 // pred_check
      _
    $region59: #{tpu_custom_call.1} parent=1 // pred_check_branch
      %68 = sbr.rel (0) target = $region61
    $region60: #{tpu_custom_call.1} parent=1 // pred_region
      _
    $region61: #{tpu_custom_call.1} parent=1 // pred_fallthru
      _
    // Predicated region
    $region62: #{tpu_custom_call.1} parent=1 // pred_check
      _
    $region63: #{tpu_custom_call.1} parent=1 // pred_check_branch
      %70 = sbr.rel (0) target = $region65
    $region64: #{tpu_custom_call.1} parent=1 // pred_region
      _
    $region65: #{tpu_custom_call.1} parent=1 // pred_fallthru
      _
    // Predicated region
    $region66: #{tpu_custom_call.1} parent=1 // pred_check
      _
    $region67: #{tpu_custom_call.1} parent=1 // pred_check_branch
      %72 = sbr.rel (0) target = $region69
    $region68: #{tpu_custom_call.1} parent=1 // pred_region
      _
    $region69: #{tpu_custom_call.1} parent=1 // pred_fallthru
      _
    // Predicated region
    $region70: #{tpu_custom_call.1} parent=1 // pred_check
      _
    $region71: #{tpu_custom_call.1} parent=1 // pred_check_branch
      %74 = sbr.rel (0) target = $region73
    $region72: #{tpu_custom_call.1} parent=1 // pred_region
      _
    $region73: #{tpu_custom_call.1} parent=1 // pred_fallthru
      _
    // Predicated region
    $region74: #{tpu_custom_call.1} parent=1 // pred_check
      _
    $region75: #{tpu_custom_call.1} parent=1 // pred_check_branch
      %76 = sbr.rel (0) target = $region77
    $region76: #{tpu_custom_call.1} parent=1 // pred_region
      _
    $region77: #{tpu_custom_call.1} parent=1 // pred_fallthru
      _
    // Predicated region
    $region78: #{tpu_custom_call.1} parent=1 // pred_check
      _
    $region79: #{tpu_custom_call.1} parent=1 // pred_check_branch
      %78 = sbr.rel (0) target = $region81
    $region80: #{tpu_custom_call.1} parent=1 // pred_region
      _
    $region81: #{tpu_custom_call.1} parent=1 // pred_fallthru
      _
    // Predicated region
    $region82: #{tpu_custom_call.1} parent=1 // pred_check
      _
    $region83: #{tpu_custom_call.1} parent=1 // pred_check_branch
      %80 = sbr.rel (0) target = $region85
    $region84: #{tpu_custom_call.1} parent=1 // pred_region
      _
    $region85: #{tpu_custom_call.1} parent=1 // pred_fallthru
      _
    // Predicated region
    $region86: #{tpu_custom_call.1} parent=1 // pred_check
      _
    $region87: #{tpu_custom_call.1} parent=1 // pred_check_branch
      %82 = sbr.rel (0) target = $region89
    $region88: #{tpu_custom_call.1} parent=1 // pred_region
      %84 = dma.done [#allocation3], 4096
    $region89: #{tpu_custom_call.1} parent=1 // pred_fallthru
      _
    %v85 = vld [vmem:[%s0] sm:$0xff]
    %v86 = vld [vmem:[%s0 + $0x8] sm:$0xff]
    %v87 = vlaneseq
    %v88 = vand.u32 %v87, 127
    %89 = vset.pattern.permute.xlu0 0
    %90 = vperm.xlu0 %89, %v85
    %v91 = vpop.permute.xlu0 %90
    %92 = vset.pattern.permute.xlu0 0
    %93 = vperm.xlu0 %92, %v86
    %v94 = vpop.permute.xlu0 %93
    %vm95 = vcmp.eq.s32.totalorder %v88, %v91
    %vm96 = vcmp.eq.s32.totalorder %v88, %v94
    %v97 = vsel %vm95, 1, 0
    %v98 = vsel %vm96, 1, 0
    %v99 = vcvt.s32.f32 %v97
    %v100 = vcvt.s32.f32 %v98
    %v101 = vld [vmem:[%s1] sm:$0xff]
    %v102 = vld [vmem:[%s1 + $0x8] sm:$0xff]
    %v103 = vadd.f32 %v99, %v101
    %v104 = vadd.f32 %v100, %v102
    %v105 = vld [vmem:[%s2] sm:$0xff]
    %v106 = vld [vmem:[%s2 + $0x8] sm:$0xff]
    %v107 = vld [vmem:[%s2 + $0x10] sm:$0xff]
    %v108 = vld [vmem:[%s2 + $0x18] sm:$0xff]
    %v109 = vld [vmem:[%s2 + $0x20] sm:$0xff]
    %v110 = vld [vmem:[%s2 + $0x28] sm:$0xff]
    %v111 = vld [vmem:[%s2 + $0x30] sm:$0xff]
    %v112 = vld [vmem:[%s2 + $0x38] sm:$0xff]
    %vm113 = vcmask 523264
    %v115 = vsel %vm113, %v103, 0
    %v118 = vsel %vm113, %v104, 0
    %120 = vmatpush.msra.mxu0 0.0
    %121 = vmatpush.msra.mxu0 0.0
    %122 = vmatpush.msra.mxu0 0.0
    %123 = vmatpush.msra.mxu0 0.0
    %124 = vmatpush.msra.mxu0 0.0
    %125 = vmatpush.msra.mxu0 0.0
    %126 = vmatpush.msra.mxu0 0.0
    %127 = vmatpush.msra.mxu0 0.0
    %128 = vmatpush.msra.mxu0 %v112
    %129 = vmatpush.msra.mxu0 %v111
    %130 = vmatpush.msra.mxu0 %v110
    %131 = vmatpush.msra.mxu0 %v109
    %132 = vmatpush.msra.mxu0 %v108
    %133 = vmatpush.msra.mxu0 %v107
    %134 = vmatpush.msra.mxu0 %v106
    %135 = vmatpush.msra.mxu0 %v105
    %136 = vmatmul.f32.gmra.mxu0 %v115
    %v137 = vpop.f32.mrf.mxu0
    %v138 = vadd.f32 0.0, %v137
    %139 = vmatmul.f32.gmra.mxu0 %v118
    %v140 = vpop.f32.mrf.mxu0
    %v141 = vadd.f32 0.0, %v140
    %142 = vdwg.mxu0
    %v143 = vld [vmem:[%s3] sm:$0x1]
    %v144 = vld [vmem:[%s4] sm:$0x1]
    %vm145 = vcmask 261120
    %v146 = vsel %vm145, %v138, 0.0
    %147 = vadd.xlane.f32.xlu0 %v146
    %v148 = vpop.xlane.xlu0 %147
    %v149 = vsel %vm145, %v141, 0.0
    %150 = vadd.xlane.f32.xlu0 %v149
    %v151 = vpop.xlane.xlu0 %150
    %v152 = vrcp.pop 32.0
    %v153 = vmul.f32 32.0, %v152
    %v154 = vsub.f32 1.0, %v153
    %v155 = vmul.f32 %v152, %v154
    %v156 = vadd.f32 %v152, %v155
    %vm157 = vweird.f32 %v152
    %v158 = vsel %vm157, %v152, %v156
    %v159 = vmul.f32 %v148, %v158
    %v160 = vmul.f32 %v151, %v158
    %v161 = vmul.f32 %v138, %v138
    %v162 = vmul.f32 %v141, %v141
    %v163 = vsel %vm145, %v161, 0.0
    %164 = vadd.xlane.f32.xlu0 %v163
    %v165 = vpop.xlane.xlu0 %164
    %v166 = vsel %vm145, %v162, 0.0
    %167 = vadd.xlane.f32.xlu0 %v166
    %v168 = vpop.xlane.xlu0 %167
    %v169 = vmul.f32 %v165, %v158
    %v170 = vmul.f32 %v168, %v158
    %v171 = vmul.f32 %v159, %v159
    %v172 = vmul.f32 %v160, %v160
    %v173 = vsub.f32 %v169, %v171
    %v174 = vsub.f32 %v170, %v172
    %v175 = vmax.f32 %v173, 0.0
    %v176 = vmax.f32 %v174, 0.0
    %v177 = vsub.f32 %v138, %v159
    %v178 = vsub.f32 %v141, %v160
    %v179 = vadd.f32 %v175, 1e-12
    %v180 = vadd.f32 %v176, 1e-12
    %v181 = vrsqrt.pop %v179
    %v182 = vmul.f32 %v181, %v179
    %v183 = vmul.f32 %v182, %v181
    %v184 = vmul.f32 0.5, %v183
    %v185 = vsub.f32 1.5, %v184
    %v186 = vmul.f32 %v181, %v185
    %vm187 = vweird.f32 %v179
    %vm188 = vweird.f32 %v181
    %vm189 = vmor %vm187, %vm188
    %v190 = vsel %vm189, %v181, %v186
    %v191 = vrsqrt.pop %v180
    %v192 = vmul.f32 %v191, %v180
    %v193 = vmul.f32 %v192, %v191
    %v194 = vmul.f32 0.5, %v193
    %v195 = vsub.f32 1.5, %v194
    %v196 = vmul.f32 %v191, %v195
    %vm197 = vweird.f32 %v180
    %vm198 = vweird.f32 %v191
    %vm199 = vmor %vm197, %vm198
    %v200 = vsel %vm199, %v191, %v196
    %v201 = vmul.f32 %v177, %v190
    %v202 = vmul.f32 %v178, %v200
    %v204 = vperm.slane %v143, 0
    %v206 = vmul.f32 %v201, %v204
    %v207 = vmul.f32 %v202, %v204
    %v209 = vperm.slane %v144, 0
    %v211 = vadd.f32 %v206, %v209
    %v212 = vadd.f32 %v207, %v209
    %v213 = vld [vmem:[%s5] sm:$0xff]
    %v214 = vld [vmem:[%s5 + $0x8] sm:$0xff]
    %v215 = vld [vmem:[%s5 + $0x10] sm:$0xff]
    %v216 = vld [vmem:[%s5 + $0x18] sm:$0xff]
    %v217 = vld [vmem:[%s5 + $0x20] sm:$0xff]
    %v218 = vld [vmem:[%s5 + $0x28] sm:$0xff]
    %v219 = vld [vmem:[%s5 + $0x30] sm:$0xff]
    %v220 = vld [vmem:[%s5 + $0x38] sm:$0xff]
    %v221 = vld [vmem:[%s6] sm:$0xff]
    %v222 = vld [vmem:[%s6 + $0x8] sm:$0xff]
    %v223 = vld [vmem:[%s6 + $0x10] sm:$0xff]
    %v224 = vld [vmem:[%s6 + $0x18] sm:$0xff]
    %v225 = vld [vmem:[%s6 + $0x20] sm:$0xff]
    %v226 = vld [vmem:[%s6 + $0x28] sm:$0xff]
    %v227 = vld [vmem:[%s6 + $0x30] sm:$0xff]
    %v228 = vld [vmem:[%s6 + $0x38] sm:$0xff]
    %v229 = vld [vmem:[%s7] sm:$0xff]
    %v230 = vld [vmem:[%s7 + $0x8] sm:$0xff]
    %v231 = vld [vmem:[%s7 + $0x10] sm:$0xff]
    %v232 = vld [vmem:[%s7 + $0x18] sm:$0xff]
    %v234 = vsel %vm145, %v211, 0
    %v237 = vsel %vm145, %v212, 0
    %239 = vmatpush.msra.mxu0 0.0
    %240 = vmatpush.msra.mxu0 0.0
    %241 = vmatpush.msra.mxu0 0.0
    %242 = vmatpush.msra.mxu0 0.0
    %243 = vmatpush.msra.mxu0 0.0
    %244 = vmatpush.msra.mxu0 0.0
    %245 = vmatpush.msra.mxu0 0.0
    %246 = vmatpush.msra.mxu0 0.0
    %247 = vmatpush.msra.mxu0 0.0
    %248 = vmatpush.msra.mxu0 0.0
    %249 = vmatpush.msra.mxu0 0.0
    %250 = vmatpush.msra.mxu0 0.0
    %251 = vmatpush.msra.mxu0 %v232
    %252 = vmatpush.msra.mxu0 %v231
    %253 = vmatpush.msra.mxu0 %v230
    %254 = vmatpush.msra.mxu0 %v229
    %255 = vmatmul.f32.gmra.mxu0 %v234
    %v256 = vpop.f32.mrf.mxu0
    %v257 = vadd.f32 0.0, %v256
    %258 = vmatmul.f32.gmra.mxu0 %v237
    %v259 = vpop.f32.mrf.mxu0
    %v260 = vadd.f32 0.0, %v259
    %261 = vdwg.mxu0
    %v262 = vld [vmem:[%s8] sm:$0xff]
    %v263 = vld [vmem:[%s8 + $0x8] sm:$0xff]
    %v264 = vld [vmem:[%s8 + $0x10] sm:$0xff]
    %v265 = vld [vmem:[%s8 + $0x18] sm:$0xff]
    %266 = vmatpush.msra.mxu0 0.0
    %267 = vmatpush.msra.mxu0 0.0
    %268 = vmatpush.msra.mxu0 0.0
    %269 = vmatpush.msra.mxu0 0.0
    %270 = vmatpush.msra.mxu0 0.0
    %271 = vmatpush.msra.mxu0 0.0
    %272 = vmatpush.msra.mxu0 0.0
    %273 = vmatpush.msra.mxu0 0.0
    %274 = vmatpush.msra.mxu0 0.0
    %275 = vmatpush.msra.mxu0 0.0
    %276 = vmatpush.msra.mxu0 0.0
    %277 = vmatpush.msra.mxu0 0.0
    %278 = vmatpush.msra.mxu0 %v265
    %279 = vmatpush.msra.mxu0 %v264
    %280 = vmatpush.msra.mxu0 %v263
    %281 = vmatpush.msra.mxu0 %v262
    %282 = vmatmul.f32.gmra.mxu0 %v234
    %v283 = vpop.f32.mrf.mxu0
    %v284 = vadd.f32 0.0, %v283
    %285 = vmatmul.f32.gmra.mxu0 %v237
    %v286 = vpop.f32.mrf.mxu0
    %v287 = vadd.f32 0.0, %v286
    %288 = vdwg.mxu0
    %v289 = vld [vmem:[#allocation2] sm:$0xff]
    %v290 = vld [vmem:[#allocation2 + $0x8] sm:$0xff]
    %v291 = vld [vmem:[#allocation2 + $0x10] sm:$0xff]
    %v292 = vld [vmem:[#allocation2 + $0x18] sm:$0xff]
    %293 = vmatpush.msra.mxu0 0.0
    %294 = vmatpush.msra.mxu0 0.0
    %295 = vmatpush.msra.mxu0 0.0
    %296 = vmatpush.msra.mxu0 0.0
    %297 = vmatpush.msra.mxu0 0.0
    %298 = vmatpush.msra.mxu0 0.0
    %299 = vmatpush.msra.mxu0 0.0
    %300 = vmatpush.msra.mxu0 0.0
    %301 = vmatpush.msra.mxu0 0.0
    %302 = vmatpush.msra.mxu0 0.0
    %303 = vmatpush.msra.mxu0 0.0
    %304 = vmatpush.msra.mxu0 0.0
    %305 = vmatpush.msra.mxu0 %v292
    %306 = vmatpush.msra.mxu0 %v291
    %307 = vmatpush.msra.mxu0 %v290
    %308 = vmatpush.msra.mxu0 %v289
    %309 = vmatmul.f32.gmra.mxu0 %v234
    %v310 = vpop.f32.mrf.mxu0
    %v311 = vadd.f32 0.0, %v310
    %312 = vmatmul.f32.gmra.mxu0 %v237
    %v313 = vpop.f32.mrf.mxu0
    %v314 = vadd.f32 0.0, %v313
    %315 = vdwg.mxu0
    %s316 = scalar_lea.vmem [#allocation2], 32
    %v317 = vld [vmem:[%s316] sm:$0xff]
    %v318 = vld [vmem:[%s316 + $0x8] sm:$0xff]
    %v319 = vld [vmem:[%s316 + $0x10] sm:$0xff]
    %v320 = vld [vmem:[%s316 + $0x18] sm:$0xff]
    %321 = vmatpush.msra.mxu0 0.0
    %322 = vmatpush.msra.mxu0 0.0
    %323 = vmatpush.msra.mxu0 0.0
    %324 = vmatpush.msra.mxu0 0.0
    %325 = vmatpush.msra.mxu0 0.0
    %326 = vmatpush.msra.mxu0 0.0
    %327 = vmatpush.msra.mxu0 0.0
    %328 = vmatpush.msra.mxu0 0.0
    %329 = vmatpush.msra.mxu0 0.0
    %330 = vmatpush.msra.mxu0 0.0
    %331 = vmatpush.msra.mxu0 0.0
    %332 = vmatpush.msra.mxu0 0.0
    %333 = vmatpush.msra.mxu0 %v320
    %334 = vmatpush.msra.mxu0 %v319
    %335 = vmatpush.msra.mxu0 %v318
    %336 = vmatpush.msra.mxu0 %v317
    %337 = vmatmul.f32.gmra.mxu0 %v234
    %v338 = vpop.f32.mrf.mxu0
    %v339 = vadd.f32 0.0, %v338
    %340 = vmatmul.f32.gmra.mxu0 %v237
    %v341 = vpop.f32.mrf.mxu0
    %v342 = vadd.f32 0.0, %v341
    %343 = vdwg.mxu0
    %s344 = scalar_lea.vmem [#allocation2], 64
    %v345 = vld [vmem:[%s344] sm:$0xff]
    %v346 = vld [vmem:[%s344 + $0x8] sm:$0xff]
    %v347 = vld [vmem:[%s344 + $0x10] sm:$0xff]
    %v348 = vld [vmem:[%s344 + $0x18] sm:$0xff]
    %349 = vmatpush.msra.mxu0 0.0
    %350 = vmatpush.msra.mxu0 0.0
    %351 = vmatpush.msra.mxu0 0.0
    %352 = vmatpush.msra.mxu0 0.0
    %353 = vmatpush.msra.mxu0 0.0
    %354 = vmatpush.msra.mxu0 0.0
    %355 = vmatpush.msra.mxu0 0.0
    %356 = vmatpush.msra.mxu0 0.0
    %357 = vmatpush.msra.mxu0 0.0
    %358 = vmatpush.msra.mxu0 0.0
    %359 = vmatpush.msra.mxu0 0.0
    %360 = vmatpush.msra.mxu0 0.0
    %361 = vmatpush.msra.mxu0 %v348
    %362 = vmatpush.msra.mxu0 %v347
    %363 = vmatpush.msra.mxu0 %v346
    %364 = vmatpush.msra.mxu0 %v345
    %365 = vmatmul.f32.gmra.mxu0 %v234
    %v366 = vpop.f32.mrf.mxu0
    %v367 = vadd.f32 0.0, %v366
    %368 = vmatmul.f32.gmra.mxu0 %v237
    %v369 = vpop.f32.mrf.mxu0
    %v370 = vadd.f32 0.0, %v369
    %371 = vdwg.mxu0
    %s372 = scalar_lea.vmem [#allocation2], 96
    %v373 = vld [vmem:[%s372] sm:$0xff]
    %v374 = vld [vmem:[%s372 + $0x8] sm:$0xff]
    %v375 = vld [vmem:[%s372 + $0x10] sm:$0xff]
    %v376 = vld [vmem:[%s372 + $0x18] sm:$0xff]
    %377 = vmatpush.msra.mxu0 0.0
    %378 = vmatpush.msra.mxu0 0.0
    %379 = vmatpush.msra.mxu0 0.0
    %380 = vmatpush.msra.mxu0 0.0
    %381 = vmatpush.msra.mxu0 0.0
    %382 = vmatpush.msra.mxu0 0.0
    %383 = vmatpush.msra.mxu0 0.0
    %384 = vmatpush.msra.mxu0 0.0
    %385 = vmatpush.msra.mxu0 0.0
    %386 = vmatpush.msra.mxu0 0.0
    %387 = vmatpush.msra.mxu0 0.0
    %388 = vmatpush.msra.mxu0 0.0
    %389 = vmatpush.msra.mxu0 %v376
    %390 = vmatpush.msra.mxu0 %v375
    %391 = vmatpush.msra.mxu0 %v374
    %392 = vmatpush.msra.mxu0 %v373
    %393 = vmatmul.f32.gmra.mxu0 %v234
    %v394 = vpop.f32.mrf.mxu0
    %v395 = vadd.f32 0.0, %v394
    %396 = vmatmul.f32.gmra.mxu0 %v237
    %v397 = vpop.f32.mrf.mxu0
    %v398 = vadd.f32 0.0, %v397
    %399 = vdwg.mxu0
    %v400 = vmul.f32 %v257, %v213
    %v401 = vmul.f32 %v260, %v214
    %v402 = vmul.f32 %v257, %v215
    %v403 = vmul.f32 %v260, %v216
    %v404 = vmul.f32 %v257, %v217
    %v405 = vmul.f32 %v260, %v218
    %v406 = vmul.f32 %v257, %v219
    %v407 = vmul.f32 %v260, %v220
    %v409 = vsel %vm145, %v400, 0
    %v412 = vsel %vm145, %v401, 0
    %v415 = vsel %vm145, %v402, 0
    %v418 = vsel %vm145, %v403, 0
    %v421 = vsel %vm145, %v404, 0
    %v424 = vsel %vm145, %v405, 0
    %v427 = vsel %vm145, %v406, 0
    %v430 = vsel %vm145, %v407, 0
    %v433 = vsel %vm145, %v284, 0
    %v436 = vsel %vm145, %v287, 0
    %438 = vmatpush.xpose.msra.mxu0 0.0
    %439 = vmatpush.xpose.msra.mxu0 0.0
    %440 = vmatpush.xpose.msra.mxu0 0.0
    %441 = vmatpush.xpose.msra.mxu0 0.0
    %442 = vmatpush.xpose.msra.mxu0 0.0
    %443 = vmatpush.xpose.msra.mxu0 0.0
    %444 = vmatpush.xpose.msra.mxu0 0.0
    %445 = vmatpush.xpose.msra.mxu0 0.0
    %446 = vmatpush.xpose.msra.mxu0 0.0
    %447 = vmatpush.xpose.msra.mxu0 0.0
    %448 = vmatpush.xpose.msra.mxu0 0.0
    %449 = vmatpush.xpose.msra.mxu0 0.0
    %450 = vmatpush.xpose.msra.mxu0 0.0
    %451 = vmatpush.xpose.msra.mxu0 0.0
    %452 = vmatpush.xpose.msra.mxu0 %v436
    %453 = vmatpush.xpose.msra.mxu0 %v433
    %454 = vmatmul.f32.gmra.mxu0 %v409
    %v455 = vpop.f32.mrf.mxu0
    %v456 = vadd.f32 %v221, %v455
    %457 = vmatmul.f32.gmra.mxu0 %v412
    %v458 = vpop.f32.mrf.mxu0
    %v459 = vadd.f32 %v222, %v458
    %460 = vmatmul.f32.gmra.mxu0 %v415
    %v461 = vpop.f32.mrf.mxu0
    %v462 = vadd.f32 %v223, %v461
    %463 = vmatmul.f32.gmra.mxu0 %v418
    %v464 = vpop.f32.mrf.mxu0
    %v465 = vadd.f32 %v224, %v464
    %466 = vmatmul.f32.gmra.mxu0 %v421
    %v467 = vpop.f32.mrf.mxu0
    %v468 = vadd.f32 %v225, %v467
    %469 = vmatmul.f32.gmra.mxu0 %v424
    %v470 = vpop.f32.mrf.mxu0
    %v471 = vadd.f32 %v226, %v470
    %472 = vmatmul.f32.gmra.mxu0 %v427
    %v473 = vpop.f32.mrf.mxu0
    %v474 = vadd.f32 %v227, %v473
    %475 = vmatmul.f32.gmra.mxu0 %v430
    %v476 = vpop.f32.mrf.mxu0
    %v477 = vadd.f32 %v228, %v476
    %478 = vdwg.mxu0
    %vm479 = vcmask 130048
    %v480 = vsel %vm479, %v456, -inf
    %481 = vmax.xlane.f32.xlu0 %v480
    %v482 = vpop.xlane.xlu0 %481
    %v483 = vsel %vm479, %v459, -inf
    %484 = vmax.xlane.f32.xlu0 %v483
    %v485 = vpop.xlane.xlu0 %484
    %v486 = vsel %vm479, %v462, -inf
    %487 = vmax.xlane.f32.xlu0 %v486
    %v488 = vpop.xlane.xlu0 %487
    %v489 = vsel %vm479, %v465, -inf
    %490 = vmax.xlane.f32.xlu0 %v489
    %v491 = vpop.xlane.xlu0 %490
    %v492 = vsel %vm479, %v468, -inf
    %493 = vmax.xlane.f32.xlu0 %v492
    %v494 = vpop.xlane.xlu0 %493
    %v495 = vsel %vm479, %v471, -inf
    %496 = vmax.xlane.f32.xlu0 %v495
    %v497 = vpop.xlane.xlu0 %496
    %v498 = vsel %vm479, %v474, -inf
    %499 = vmax.xlane.f32.xlu0 %v498
    %v500 = vpop.xlane.xlu0 %499
    %v501 = vsel %vm479, %v477, -inf
    %502 = vmax.xlane.f32.xlu0 %v501
    %v503 = vpop.xlane.xlu0 %502
    %v504 = vsub.f32 %v456, %v482
    %v505 = vsub.f32 %v459, %v485
    %v506 = vsub.f32 %v462, %v488
    %v507 = vsub.f32 %v465, %v491
    %v508 = vsub.f32 %v468, %v494
    %v509 = vsub.f32 %v471, %v497
    %v510 = vsub.f32 %v474, %v500
    %v511 = vsub.f32 %v477, %v503
    %v512 = vmul.f32 %v504, 1.442695
    %v513 = vpow.pop %v512
    %v514 = vmul.f32 %v505, 1.442695
    %v515 = vpow.pop %v514
    %v516 = vmul.f32 %v506, 1.442695
    %v517 = vpow.pop %v516
    %v518 = vmul.f32 %v507, 1.442695
    %v519 = vpow.pop %v518
    %v520 = vmul.f32 %v508, 1.442695
    %v521 = vpow.pop %v520
    %v522 = vmul.f32 %v509, 1.442695
    %v523 = vpow.pop %v522
    %v524 = vmul.f32 %v510, 1.442695
    %v525 = vpow.pop %v524
    %v526 = vmul.f32 %v511, 1.442695
    %v527 = vpow.pop %v526
    %v528 = vsel %vm479, %v513, 0.0
    %529 = vadd.xlane.f32.xlu0 %v528
    %v530 = vpop.xlane.xlu0 %529
    %v531 = vsel %vm479, %v515, 0.0
    %532 = vadd.xlane.f32.xlu0 %v531
    %v533 = vpop.xlane.xlu0 %532
    %v534 = vsel %vm479, %v517, 0.0
    %535 = vadd.xlane.f32.xlu0 %v534
    %v536 = vpop.xlane.xlu0 %535
    %v537 = vsel %vm479, %v519, 0.0
    %538 = vadd.xlane.f32.xlu0 %v537
    %v539 = vpop.xlane.xlu0 %538
    %v540 = vsel %vm479, %v521, 0.0
    %541 = vadd.xlane.f32.xlu0 %v540
    %v542 = vpop.xlane.xlu0 %541
    %v543 = vsel %vm479, %v523, 0.0
    %544 = vadd.xlane.f32.xlu0 %v543
    %v545 = vpop.xlane.xlu0 %544
    %v546 = vsel %vm479, %v525, 0.0
    %547 = vadd.xlane.f32.xlu0 %v546
    %v548 = vpop.xlane.xlu0 %547
    %v549 = vsel %vm479, %v527, 0.0
    %550 = vadd.xlane.f32.xlu0 %v549
    %v551 = vpop.xlane.xlu0 %550
    %v552 = vrcp.pop %v530
    %v553 = vrcp.pop %v533
    %v554 = vrcp.pop %v536
    %v555 = vrcp.pop %v539
    %v556 = vrcp.pop %v542
    %v557 = vrcp.pop %v545
    %v558 = vrcp.pop %v548
    %v559 = vrcp.pop %v551
    %v560 = vmul.f32 %v530, %v552
    %v561 = vmul.f32 %v533, %v553
    %v562 = vmul.f32 %v536, %v554
    %v563 = vmul.f32 %v539, %v555
    %v564 = vmul.f32 %v542, %v556
    %v565 = vmul.f32 %v545, %v557
    %v566 = vmul.f32 %v548, %v558
    %v567 = vmul.f32 %v551, %v559
    %v568 = vsub.f32 2.0, %v560
    %v569 = vsub.f32 2.0, %v561
    %v570 = vsub.f32 2.0, %v562
    %v571 = vsub.f32 2.0, %v563
    %v572 = vsub.f32 2.0, %v564
    %v573 = vsub.f32 2.0, %v565
    %v574 = vsub.f32 2.0, %v566
    %v575 = vsub.f32 2.0, %v567
    %v576 = vmul.f32 %v552, %v568
    %v577 = vmul.f32 %v553, %v569
    %v578 = vmul.f32 %v554, %v570
    %v579 = vmul.f32 %v555, %v571
    %v580 = vmul.f32 %v556, %v572
    %v581 = vmul.f32 %v557, %v573
    %v582 = vmul.f32 %v558, %v574
    %v583 = vmul.f32 %v559, %v575
    %v584 = vmul.f32 %v513, %v576
    %v585 = vmul.f32 %v515, %v577
    %v586 = vmul.f32 %v517, %v578
    %v587 = vmul.f32 %v519, %v579
    %v588 = vmul.f32 %v521, %v580
    %v589 = vmul.f32 %v523, %v581
    %v590 = vmul.f32 %v525, %v582
    %v591 = vmul.f32 %v527, %v583
    %v593 = vsel %vm479, %v586, 0
    %v596 = vsel %vm479, %v587, 0
    %598 = vmatpush.msra.mxu0 0.0
    %599 = vmatpush.msra.mxu0 0.0
    %600 = vmatpush.msra.mxu0 0.0
    %601 = vmatpush.msra.mxu0 0.0
    %602 = vmatpush.msra.mxu0 0.0
    %603 = vmatpush.msra.mxu0 0.0
    %604 = vmatpush.msra.mxu0 0.0
    %605 = vmatpush.msra.mxu0 0.0
    %606 = vmatpush.msra.mxu0 0.0
    %607 = vmatpush.msra.mxu0 0.0
    %608 = vmatpush.msra.mxu0 0.0
    %609 = vmatpush.msra.mxu0 0.0
    %610 = vmatpush.msra.mxu0 0.0
    %611 = vmatpush.msra.mxu0 0.0
    %612 = vmatpush.msra.mxu0 %v342
    %613 = vmatpush.msra.mxu0 %v339
    %614 = vmatmul.f32.gmra.mxu0 %v593
    %v615 = vpop.f32.mrf.mxu0
    %v616 = vadd.f32 0.0, %v615
    %617 = vmatmul.f32.gmra.mxu0 %v596
    %v618 = vpop.f32.mrf.mxu0
    %v619 = vadd.f32 0.0, %v618
    %620 = vdwg.mxu0
    %v622 = vsel %vm479, %v584, 0
    %v625 = vsel %vm479, %v585, 0
    %627 = vmatpush.msra.mxu0 0.0
    %628 = vmatpush.msra.mxu0 0.0
    %629 = vmatpush.msra.mxu0 0.0
    %630 = vmatpush.msra.mxu0 0.0
    %631 = vmatpush.msra.mxu0 0.0
    %632 = vmatpush.msra.mxu0 0.0
    %633 = vmatpush.msra.mxu0 0.0
    %634 = vmatpush.msra.mxu0 0.0
    %635 = vmatpush.msra.mxu0 0.0
    %636 = vmatpush.msra.mxu0 0.0
    %637 = vmatpush.msra.mxu0 0.0
    %638 = vmatpush.msra.mxu0 0.0
    %639 = vmatpush.msra.mxu0 0.0
    %640 = vmatpush.msra.mxu0 0.0
    %641 = vmatpush.msra.mxu0 %v314
    %642 = vmatpush.msra.mxu0 %v311
    %643 = vmatmul.f32.gmra.mxu0 %v622
    %v644 = vpop.f32.mrf.mxu0
    %v645 = vadd.f32 %v616, %v644
    %646 = vmatmul.f32.gmra.mxu0 %v625
    %v647 = vpop.f32.mrf.mxu0
    %v648 = vadd.f32 %v619, %v647
    %649 = vdwg.mxu0
    %v651 = vsel %vm479, %v588, 0
    %v654 = vsel %vm479, %v589, 0
    %656 = vmatpush.msra.mxu0 0.0
    %657 = vmatpush.msra.mxu0 0.0
    %658 = vmatpush.msra.mxu0 0.0
    %659 = vmatpush.msra.mxu0 0.0
    %660 = vmatpush.msra.mxu0 0.0
    %661 = vmatpush.msra.mxu0 0.0
    %662 = vmatpush.msra.mxu0 0.0
    %663 = vmatpush.msra.mxu0 0.0
    %664 = vmatpush.msra.mxu0 0.0
    %665 = vmatpush.msra.mxu0 0.0
    %666 = vmatpush.msra.mxu0 0.0
    %667 = vmatpush.msra.mxu0 0.0
    %668 = vmatpush.msra.mxu0 0.0
    %669 = vmatpush.msra.mxu0 0.0
    %670 = vmatpush.msra.mxu0 %v370
    %671 = vmatpush.msra.mxu0 %v367
    %672 = vmatmul.f32.gmra.mxu0 %v651
    %v673 = vpop.f32.mrf.mxu0
    %v674 = vadd.f32 0.0, %v673
    %675 = vmatmul.f32.gmra.mxu0 %v654
    %v676 = vpop.f32.mrf.mxu0
    %v677 = vadd.f32 0.0, %v676
    %678 = vdwg.mxu0
    %v679 = vadd.f32 %v645, %v674
    %v680 = vadd.f32 %v648, %v677
    %v682 = vsel %vm479, %v590, 0
    %v685 = vsel %vm479, %v591, 0
    %687 = vmatpush.msra.mxu0 0.0
    %688 = vmatpush.msra.mxu0 0.0
    %689 = vmatpush.msra.mxu0 0.0
    %690 = vmatpush.msra.mxu0 0.0
    %691 = vmatpush.msra.mxu0 0.0
    %692 = vmatpush.msra.mxu0 0.0
    %693 = vmatpush.msra.mxu0 0.0
    %694 = vmatpush.msra.mxu0 0.0
    %695 = vmatpush.msra.mxu0 0.0
    %696 = vmatpush.msra.mxu0 0.0
    %697 = vmatpush.msra.mxu0 0.0
    %698 = vmatpush.msra.mxu0 0.0
    %699 = vmatpush.msra.mxu0 0.0
    %700 = vmatpush.msra.mxu0 0.0
    %701 = vmatpush.msra.mxu0 %v398
    %702 = vmatpush.msra.mxu0 %v395
    %703 = vmatmul.f32.gmra.mxu0 %v682
    %v704 = vpop.f32.mrf.mxu0
    %v705 = vadd.f32 0.0, %v704
    %706 = vmatmul.f32.gmra.mxu0 %v685
    %v707 = vpop.f32.mrf.mxu0
    %v708 = vadd.f32 0.0, %v707
    %709 = vdwg.mxu0
    %v710 = vadd.f32 %v679, %v705
    %v711 = vadd.f32 %v680, %v708
    %v712 = vld [vmem:[%s10] sm:$0x1]
    %v714 = vperm.slane %v712, 0
    %v716 = vadd.f32 %v710, %v714
    %v717 = vadd.f32 %v711, %v714
    %v718 = vadd.f32 %v211, %v716
    %v719 = vadd.f32 %v212, %v717
    %v720 = vld [vmem:[%s11] sm:$0x1]
    %v721 = vld [vmem:[%s12] sm:$0x1]
    %v722 = vsel %vm145, %v718, 0.0
    %723 = vadd.xlane.f32.xlu0 %v722
    %v724 = vpop.xlane.xlu0 %723
    %v725 = vsel %vm145, %v719, 0.0
    %726 = vadd.xlane.f32.xlu0 %v725
    %v727 = vpop.xlane.xlu0 %726
    %v728 = vmul.f32 %v724, %v158
    %v729 = vmul.f32 %v727, %v158
    %v730 = vmul.f32 %v718, %v718
    %v731 = vmul.f32 %v719, %v719
    %v732 = vsel %vm145, %v730, 0.0
    %733 = vadd.xlane.f32.xlu0 %v732
    %v734 = vpop.xlane.xlu0 %733
    %v735 = vsel %vm145, %v731, 0.0
    %736 = vadd.xlane.f32.xlu0 %v735
    %v737 = vpop.xlane.xlu0 %736
    %v738 = vmul.f32 %v734, %v158
    %v739 = vmul.f32 %v737, %v158
    %v740 = vmul.f32 %v728, %v728
    %v741 = vmul.f32 %v729, %v729
    %v742 = vsub.f32 %v738, %v740
    %v743 = vsub.f32 %v739, %v741
    %v744 = vmax.f32 %v742, 0.0
    %v745 = vmax.f32 %v743, 0.0
    %v746 = vsub.f32 %v718, %v728
    %v747 = vsub.f32 %v719, %v729
    %v748 = vadd.f32 %v744, 1e-06
    %v749 = vadd.f32 %v745, 1e-06
    %v750 = vrsqrt.pop %v748
    %v751 = vmul.f32 %v750, %v748
    %v752 = vmul.f32 %v751, %v750
    %v753 = vmul.f32 0.5, %v752
    %v754 = vsub.f32 1.5, %v753
    %v755 = vmul.f32 %v750, %v754
    %vm756 = vweird.f32 %v748
    %vm757 = vweird.f32 %v750
    %vm758 = vmor %vm756, %vm757
    %v759 = vsel %vm758, %v750, %v755
    %v760 = vrsqrt.pop %v749
    %v761 = vmul.f32 %v760, %v749
    %v762 = vmul.f32 %v761, %v760
    %v763 = vmul.f32 0.5, %v762
    %v764 = vsub.f32 1.5, %v763
    %v765 = vmul.f32 %v760, %v764
    %vm766 = vweird.f32 %v749
    %vm767 = vweird.f32 %v760
    %vm768 = vmor %vm766, %vm767
    %v769 = vsel %vm768, %v760, %v765
    %v770 = vmul.f32 %v746, %v759
    %v771 = vmul.f32 %v747, %v769
    %v773 = vperm.slane %v720, 0
    %v775 = vmul.f32 %v770, %v773
    %v776 = vmul.f32 %v771, %v773
    %v778 = vperm.slane %v721, 0
    %v780 = vadd.f32 %v775, %v778
    %v781 = vadd.f32 %v776, %v778
    %v782 = vld [vmem:[%s13] sm:$0xff]
    %v783 = vld [vmem:[%s13 + $0x8] sm:$0xff]
    %v784 = vld [vmem:[%s13 + $0x10] sm:$0xff]
    %v785 = vld [vmem:[%s13 + $0x18] sm:$0xff]
    %v786 = vld [vmem:[%s14] sm:$0x1]
    %v788 = vperm.slane %v786, 0
    %v791 = vsel %vm145, %v780, 0
    %v794 = vsel %vm145, %v781, 0
    %796 = vmatpush.msra.mxu0 0.0
    %797 = vmatpush.msra.mxu0 0.0
    %798 = vmatpush.msra.mxu0 0.0
    %799 = vmatpush.msra.mxu0 0.0
    %800 = vmatpush.msra.mxu0 0.0
    %801 = vmatpush.msra.mxu0 0.0
    %802 = vmatpush.msra.mxu0 0.0
    %803 = vmatpush.msra.mxu0 0.0
    %804 = vmatpush.msra.mxu0 0.0
    %805 = vmatpush.msra.mxu0 0.0
    %806 = vmatpush.msra.mxu0 0.0
    %807 = vmatpush.msra.mxu0 0.0
    %808 = vmatpush.msra.mxu0 %v785
    %809 = vmatpush.msra.mxu0 %v784
    %810 = vmatpush.msra.mxu0 %v783
    %811 = vmatpush.msra.mxu0 %v782
    %812 = vmatmul.f32.gmra.mxu0 %v791
    %v813 = vpop.f32.mrf.mxu0
    %v814 = vadd.f32 %v788, %v813
    %815 = vmatmul.f32.gmra.mxu0 %v794
    %v816 = vpop.f32.mrf.mxu0
    %v817 = vadd.f32 %v788, %v816
    %818 = vdwg.mxu0
    %v819 = vmax.f32 %v814, 0.0
    %v820 = vmax.f32 %v817, 0.0
    %v821 = vld [vmem:[%s15] sm:$0xff]
    %v822 = vld [vmem:[%s15 + $0x8] sm:$0xff]
    %v823 = vld [vmem:[%s15 + $0x10] sm:$0xff]
    %v824 = vld [vmem:[%s15 + $0x18] sm:$0xff]
    %v825 = vld [vmem:[%s15 + $0x20] sm:$0xff]
    %v826 = vld [vmem:[%s15 + $0x28] sm:$0xff]
    %v827 = vld [vmem:[%s15 + $0x30] sm:$0xff]
    %v828 = vld [vmem:[%s15 + $0x38] sm:$0xff]
    %v829 = vld [vmem:[%s16] sm:$0x1]
    %v831 = vperm.slane %v829, 0
    %v834 = vsel %vm113, %v819, 0
    %v837 = vsel %vm113, %v820, 0
    %839 = vmatpush.msra.mxu0 0.0
    %840 = vmatpush.msra.mxu0 0.0
    %841 = vmatpush.msra.mxu0 0.0
    %842 = vmatpush.msra.mxu0 0.0
    %843 = vmatpush.msra.mxu0 0.0
    %844 = vmatpush.msra.mxu0 0.0
    %845 = vmatpush.msra.mxu0 0.0
    %846 = vmatpush.msra.mxu0 0.0
    %847 = vmatpush.msra.mxu0 %v828
    %848 = vmatpush.msra.mxu0 %v827
    %849 = vmatpush.msra.mxu0 %v826
    %850 = vmatpush.msra.mxu0 %v825
    %851 = vmatpush.msra.mxu0 %v824
    %852 = vmatpush.msra.mxu0 %v823
    %853 = vmatpush.msra.mxu0 %v822
    %854 = vmatpush.msra.mxu0 %v821
    %855 = vmatmul.f32.gmra.mxu0 %v834
    %v856 = vpop.f32.mrf.mxu0
    %v857 = vadd.f32 %v831, %v856
    %858 = vmatmul.f32.gmra.mxu0 %v837
    %v859 = vpop.f32.mrf.mxu0
    %v860 = vadd.f32 %v831, %v859
    %861 = vdwg.mxu0
    %v862 = vadd.f32 %v780, %v857
    %v863 = vadd.f32 %v781, %v860
    %v864 = vld [vmem:[%s17] sm:$0x1]
    %v865 = vld [vmem:[%s18] sm:$0x1]
    %v866 = vsel %vm145, %v862, 0.0
    %867 = vadd.xlane.f32.xlu0 %v866
    %v868 = vpop.xlane.xlu0 %867
    %v869 = vsel %vm145, %v863, 0.0
    %870 = vadd.xlane.f32.xlu0 %v869
    %v871 = vpop.xlane.xlu0 %870
    %v872 = vmul.f32 %v868, %v158
    %v873 = vmul.f32 %v871, %v158
    %v874 = vmul.f32 %v862, %v862
    %v875 = vmul.f32 %v863, %v863
    %v876 = vsel %vm145, %v874, 0.0
    %877 = vadd.xlane.f32.xlu0 %v876
    %v878 = vpop.xlane.xlu0 %877
    %v879 = vsel %vm145, %v875, 0.0
    %880 = vadd.xlane.f32.xlu0 %v879
    %v881 = vpop.xlane.xlu0 %880
    %v882 = vmul.f32 %v878, %v158
    %v883 = vmul.f32 %v881, %v158
    %v884 = vmul.f32 %v872, %v872
    %v885 = vmul.f32 %v873, %v873
    %v886 = vsub.f32 %v882, %v884
    %v887 = vsub.f32 %v883, %v885
    %v888 = vmax.f32 %v886, 0.0
    %v889 = vmax.f32 %v887, 0.0
    %v890 = vsub.f32 %v862, %v872
    %v891 = vsub.f32 %v863, %v873
    %v892 = vadd.f32 %v888, 1e-06
    %v893 = vadd.f32 %v889, 1e-06
    %v894 = vrsqrt.pop %v892
    %v895 = vmul.f32 %v894, %v892
    %v896 = vmul.f32 %v895, %v894
    %v897 = vmul.f32 0.5, %v896
    %v898 = vsub.f32 1.5, %v897
    %v899 = vmul.f32 %v894, %v898
    %vm900 = vweird.f32 %v892
    %vm901 = vweird.f32 %v894
    %vm902 = vmor %vm900, %vm901
    %v903 = vsel %vm902, %v894, %v899
    %v904 = vrsqrt.pop %v893
    %v905 = vmul.f32 %v904, %v893
    %v906 = vmul.f32 %v905, %v904
    %v907 = vmul.f32 0.5, %v906
    %v908 = vsub.f32 1.5, %v907
    %v909 = vmul.f32 %v904, %v908
    %vm910 = vweird.f32 %v893
    %vm911 = vweird.f32 %v904
    %vm912 = vmor %vm910, %vm911
    %v913 = vsel %vm912, %v904, %v909
    %v914 = vmul.f32 %v890, %v903
    %v915 = vmul.f32 %v891, %v913
    %v917 = vperm.slane %v864, 0
    %v919 = vmul.f32 %v914, %v917
    %v920 = vmul.f32 %v915, %v917
    %v922 = vperm.slane %v865, 0
    %v924 = vadd.f32 %v919, %v922
    %v925 = vadd.f32 %v920, %v922
    %s926 = scalar_lea.vmem %s7, 32
    %v927 = vld [vmem:[%s926] sm:$0xff]
    %v928 = vld [vmem:[%s926 + $0x8] sm:$0xff]
    %v929 = vld [vmem:[%s926 + $0x10] sm:$0xff]
    %v930 = vld [vmem:[%s926 + $0x18] sm:$0xff]
    %v932 = vsel %vm145, %v924, 0
    %v935 = vsel %vm145, %v925, 0
    %937 = vmatpush.msra.mxu0 0.0
    %938 = vmatpush.msra.mxu0 0.0
    %939 = vmatpush.msra.mxu0 0.0
    %940 = vmatpush.msra.mxu0 0.0
    %941 = vmatpush.msra.mxu0 0.0
    %942 = vmatpush.msra.mxu0 0.0
    %943 = vmatpush.msra.mxu0 0.0
    %944 = vmatpush.msra.mxu0 0.0
    %945 = vmatpush.msra.mxu0 0.0
    %946 = vmatpush.msra.mxu0 0.0
    %947 = vmatpush.msra.mxu0 0.0
    %948 = vmatpush.msra.mxu0 0.0
    %949 = vmatpush.msra.mxu0 %v930
    %950 = vmatpush.msra.mxu0 %v929
    %951 = vmatpush.msra.mxu0 %v928
    %952 = vmatpush.msra.mxu0 %v927
    %953 = vmatmul.f32.gmra.mxu0 %v932
    %v954 = vpop.f32.mrf.mxu0
    %v955 = vadd.f32 0.0, %v954
    %956 = vmatmul.f32.gmra.mxu0 %v935
    %v957 = vpop.f32.mrf.mxu0
    %v958 = vadd.f32 0.0, %v957
    %959 = vdwg.mxu0
    %s960 = scalar_lea.vmem %s8, 32
    %v961 = vld [vmem:[%s960] sm:$0xff]
    %v962 = vld [vmem:[%s960 + $0x8] sm:$0xff]
    %v963 = vld [vmem:[%s960 + $0x10] sm:$0xff]
    %v964 = vld [vmem:[%s960 + $0x18] sm:$0xff]
    %965 = vmatpush.msra.mxu0 0.0
    %966 = vmatpush.msra.mxu0 0.0
    %967 = vmatpush.msra.mxu0 0.0
    %968 = vmatpush.msra.mxu0 0.0
    %969 = vmatpush.msra.mxu0 0.0
    %970 = vmatpush.msra.mxu0 0.0
    %971 = vmatpush.msra.mxu0 0.0
    %972 = vmatpush.msra.mxu0 0.0
    %973 = vmatpush.msra.mxu0 0.0
    %974 = vmatpush.msra.mxu0 0.0
    %975 = vmatpush.msra.mxu0 0.0
    %976 = vmatpush.msra.mxu0 0.0
    %977 = vmatpush.msra.mxu0 %v964
    %978 = vmatpush.msra.mxu0 %v963
    %979 = vmatpush.msra.mxu0 %v962
    %980 = vmatpush.msra.mxu0 %v961
    %981 = vmatmul.f32.gmra.mxu0 %v932
    %v982 = vpop.f32.mrf.mxu0
    %v983 = vadd.f32 0.0, %v982
    %984 = vmatmul.f32.gmra.mxu0 %v935
    %v985 = vpop.f32.mrf.mxu0
    %v986 = vadd.f32 0.0, %v985
    %987 = vdwg.mxu0
    %s988 = scalar_lea.vmem [#allocation2], 128
    %v989 = vld [vmem:[%s988] sm:$0xff]
    %v990 = vld [vmem:[%s988 + $0x8] sm:$0xff]
    %v991 = vld [vmem:[%s988 + $0x10] sm:$0xff]
    %v992 = vld [vmem:[%s988 + $0x18] sm:$0xff]
    %993 = vmatpush.msra.mxu0 0.0
    %994 = vmatpush.msra.mxu0 0.0
    %995 = vmatpush.msra.mxu0 0.0
    %996 = vmatpush.msra.mxu0 0.0
    %997 = vmatpush.msra.mxu0 0.0
    %998 = vmatpush.msra.mxu0 0.0
    %999 = vmatpush.msra.mxu0 0.0
    %1000 = vmatpush.msra.mxu0 0.0
    %1001 = vmatpush.msra.mxu0 0.0
    %1002 = vmatpush.msra.mxu0 0.0
    %1003 = vmatpush.msra.mxu0 0.0
    %1004 = vmatpush.msra.mxu0 0.0
    %1005 = vmatpush.msra.mxu0 %v992
    %1006 = vmatpush.msra.mxu0 %v991
    %1007 = vmatpush.msra.mxu0 %v990
    %1008 = vmatpush.msra.mxu0 %v989
    %1009 = vmatmul.f32.gmra.mxu0 %v932
    %v1010 = vpop.f32.mrf.mxu0
    %v1011 = vadd.f32 0.0, %v1010
    %1012 = vmatmul.f32.gmra.mxu0 %v935
    %v1013 = vpop.f32.mrf.mxu0
    %v1014 = vadd.f32 0.0, %v1013
    %1015 = vdwg.mxu0
    %s1016 = scalar_lea.vmem [#allocation2], 160
    %v1017 = vld [vmem:[%s1016] sm:$0xff]
    %v1018 = vld [vmem:[%s1016 + $0x8] sm:$0xff]
    %v1019 = vld [vmem:[%s1016 + $0x10] sm:$0xff]
    %v1020 = vld [vmem:[%s1016 + $0x18] sm:$0xff]
    %1021 = vmatpush.msra.mxu0 0.0
    %1022 = vmatpush.msra.mxu0 0.0
    %1023 = vmatpush.msra.mxu0 0.0
    %1024 = vmatpush.msra.mxu0 0.0
    %1025 = vmatpush.msra.mxu0 0.0
    %1026 = vmatpush.msra.mxu0 0.0
    %1027 = vmatpush.msra.mxu0 0.0
    %1028 = vmatpush.msra.mxu0 0.0
    %1029 = vmatpush.msra.mxu0 0.0
    %1030 = vmatpush.msra.mxu0 0.0
    %1031 = vmatpush.msra.mxu0 0.0
    %1032 = vmatpush.msra.mxu0 0.0
    %1033 = vmatpush.msra.mxu0 %v1020
    %1034 = vmatpush.msra.mxu0 %v1019
    %1035 = vmatpush.msra.mxu0 %v1018
    %1036 = vmatpush.msra.mxu0 %v1017
    %1037 = vmatmul.f32.gmra.mxu0 %v932
    %v1038 = vpop.f32.mrf.mxu0
    %v1039 = vadd.f32 0.0, %v1038
    %1040 = vmatmul.f32.gmra.mxu0 %v935
    %v1041 = vpop.f32.mrf.mxu0
    %v1042 = vadd.f32 0.0, %v1041
    %1043 = vdwg.mxu0
    %s1044 = scalar_lea.vmem [#allocation2], 192
    %v1045 = vld [vmem:[%s1044] sm:$0xff]
    %v1046 = vld [vmem:[%s1044 + $0x8] sm:$0xff]
    %v1047 = vld [vmem:[%s1044 + $0x10] sm:$0xff]
    %v1048 = vld [vmem:[%s1044 + $0x18] sm:$0xff]
    %1049 = vmatpush.msra.mxu0 0.0
    %1050 = vmatpush.msra.mxu0 0.0
    %1051 = vmatpush.msra.mxu0 0.0
    %1052 = vmatpush.msra.mxu0 0.0
    %1053 = vmatpush.msra.mxu0 0.0
    %1054 = vmatpush.msra.mxu0 0.0
    %1055 = vmatpush.msra.mxu0 0.0
    %1056 = vmatpush.msra.mxu0 0.0
    %1057 = vmatpush.msra.mxu0 0.0
    %1058 = vmatpush.msra.mxu0 0.0
    %1059 = vmatpush.msra.mxu0 0.0
    %1060 = vmatpush.msra.mxu0 0.0
    %1061 = vmatpush.msra.mxu0 %v1048
    %1062 = vmatpush.msra.mxu0 %v1047
    %1063 = vmatpush.msra.mxu0 %v1046
    %1064 = vmatpush.msra.mxu0 %v1045
    %1065 = vmatmul.f32.gmra.mxu0 %v932
    %v1066 = vpop.f32.mrf.mxu0
    %v1067 = vadd.f32 0.0, %v1066
    %1068 = vmatmul.f32.gmra.mxu0 %v935
    %v1069 = vpop.f32.mrf.mxu0
    %v1070 = vadd.f32 0.0, %v1069
    %1071 = vdwg.mxu0
    %s1072 = scalar_lea.vmem [#allocation2], 224
    %v1073 = vld [vmem:[%s1072] sm:$0xff]
    %v1074 = vld [vmem:[%s1072 + $0x8] sm:$0xff]
    %v1075 = vld [vmem:[%s1072 + $0x10] sm:$0xff]
    %v1076 = vld [vmem:[%s1072 + $0x18] sm:$0xff]
    %1077 = vmatpush.msra.mxu0 0.0
    %1078 = vmatpush.msra.mxu0 0.0
    %1079 = vmatpush.msra.mxu0 0.0
    %1080 = vmatpush.msra.mxu0 0.0
    %1081 = vmatpush.msra.mxu0 0.0
    %1082 = vmatpush.msra.mxu0 0.0
    %1083 = vmatpush.msra.mxu0 0.0
    %1084 = vmatpush.msra.mxu0 0.0
    %1085 = vmatpush.msra.mxu0 0.0
    %1086 = vmatpush.msra.mxu0 0.0
    %1087 = vmatpush.msra.mxu0 0.0
    %1088 = vmatpush.msra.mxu0 0.0
    %1089 = vmatpush.msra.mxu0 %v1076
    %1090 = vmatpush.msra.mxu0 %v1075
    %1091 = vmatpush.msra.mxu0 %v1074
    %1092 = vmatpush.msra.mxu0 %v1073
    %1093 = vmatmul.f32.gmra.mxu0 %v932
    %v1094 = vpop.f32.mrf.mxu0
    %v1095 = vadd.f32 0.0, %v1094
    %1096 = vmatmul.f32.gmra.mxu0 %v935
    %v1097 = vpop.f32.mrf.mxu0
    %v1098 = vadd.f32 0.0, %v1097
    %1099 = vdwg.mxu0
    %v1100 = vmul.f32 %v955, %v213
    %v1101 = vmul.f32 %v958, %v214
    %v1102 = vmul.f32 %v955, %v215
    %v1103 = vmul.f32 %v958, %v216
    %v1104 = vmul.f32 %v955, %v217
    %v1105 = vmul.f32 %v958, %v218
    %v1106 = vmul.f32 %v955, %v219
    %v1107 = vmul.f32 %v958, %v220
    %v1109 = vsel %vm145, %v1100, 0
    %v1112 = vsel %vm145, %v1101, 0
    %v1115 = vsel %vm145, %v1102, 0
    %v1118 = vsel %vm145, %v1103, 0
    %v1121 = vsel %vm145, %v1104, 0
    %v1124 = vsel %vm145, %v1105, 0
    %v1127 = vsel %vm145, %v1106, 0
    %v1130 = vsel %vm145, %v1107, 0
    %v1133 = vsel %vm145, %v983, 0
    %v1136 = vsel %vm145, %v986, 0
    %1138 = vmatpush.xpose.msra.mxu0 0.0
    %1139 = vmatpush.xpose.msra.mxu0 0.0
    %1140 = vmatpush.xpose.msra.mxu0 0.0
    %1141 = vmatpush.xpose.msra.mxu0 0.0
    %1142 = vmatpush.xpose.msra.mxu0 0.0
    %1143 = vmatpush.xpose.msra.mxu0 0.0
    %1144 = vmatpush.xpose.msra.mxu0 0.0
    %1145 = vmatpush.xpose.msra.mxu0 0.0
    %1146 = vmatpush.xpose.msra.mxu0 0.0
    %1147 = vmatpush.xpose.msra.mxu0 0.0
    %1148 = vmatpush.xpose.msra.mxu0 0.0
    %1149 = vmatpush.xpose.msra.mxu0 0.0
    %1150 = vmatpush.xpose.msra.mxu0 0.0
    %1151 = vmatpush.xpose.msra.mxu0 0.0
    %1152 = vmatpush.xpose.msra.mxu0 %v1136
    %1153 = vmatpush.xpose.msra.mxu0 %v1133
    %1154 = vmatmul.f32.gmra.mxu0 %v1109
    %v1155 = vpop.f32.mrf.mxu0
    %v1156 = vadd.f32 %v221, %v1155
    %1157 = vmatmul.f32.gmra.mxu0 %v1112
    %v1158 = vpop.f32.mrf.mxu0
    %v1159 = vadd.f32 %v222, %v1158
    %1160 = vmatmul.f32.gmra.mxu0 %v1115
    %v1161 = vpop.f32.mrf.mxu0
    %v1162 = vadd.f32 %v223, %v1161
    %1163 = vmatmul.f32.gmra.mxu0 %v1118
    %v1164 = vpop.f32.mrf.mxu0
    %v1165 = vadd.f32 %v224, %v1164
    %1166 = vmatmul.f32.gmra.mxu0 %v1121
    %v1167 = vpop.f32.mrf.mxu0
    %v1168 = vadd.f32 %v225, %v1167
    %1169 = vmatmul.f32.gmra.mxu0 %v1124
    %v1170 = vpop.f32.mrf.mxu0
    %v1171 = vadd.f32 %v226, %v1170
    %1172 = vmatmul.f32.gmra.mxu0 %v1127
    %v1173 = vpop.f32.mrf.mxu0
    %v1174 = vadd.f32 %v227, %v1173
    %1175 = vmatmul.f32.gmra.mxu0 %v1130
    %v1176 = vpop.f32.mrf.mxu0
    %v1177 = vadd.f32 %v228, %v1176
    %1178 = vdwg.mxu0
    %v1179 = vsel %vm479, %v1156, -inf
    %1180 = vmax.xlane.f32.xlu0 %v1179
    %v1181 = vpop.xlane.xlu0 %1180
    %v1182 = vsel %vm479, %v1159, -inf
    %1183 = vmax.xlane.f32.xlu0 %v1182
    %v1184 = vpop.xlane.xlu0 %1183
    %v1185 = vsel %vm479, %v1162, -inf
    %1186 = vmax.xlane.f32.xlu0 %v1185
    %v1187 = vpop.xlane.xlu0 %1186
    %v1188 = vsel %vm479, %v1165, -inf
    %1189 = vmax.xlane.f32.xlu0 %v1188
    %v1190 = vpop.xlane.xlu0 %1189
    %v1191 = vsel %vm479, %v1168, -inf
    %1192 = vmax.xlane.f32.xlu0 %v1191
    %v1193 = vpop.xlane.xlu0 %1192
    %v1194 = vsel %vm479, %v1171, -inf
    %1195 = vmax.xlane.f32.xlu0 %v1194
    %v1196 = vpop.xlane.xlu0 %1195
    %v1197 = vsel %vm479, %v1174, -inf
    %1198 = vmax.xlane.f32.xlu0 %v1197
    %v1199 = vpop.xlane.xlu0 %1198
    %v1200 = vsel %vm479, %v1177, -inf
    %1201 = vmax.xlane.f32.xlu0 %v1200
    %v1202 = vpop.xlane.xlu0 %1201
    %v1203 = vsub.f32 %v1156, %v1181
    %v1204 = vsub.f32 %v1159, %v1184
    %v1205 = vsub.f32 %v1162, %v1187
    %v1206 = vsub.f32 %v1165, %v1190
    %v1207 = vsub.f32 %v1168, %v1193
    %v1208 = vsub.f32 %v1171, %v1196
    %v1209 = vsub.f32 %v1174, %v1199
    %v1210 = vsub.f32 %v1177, %v1202
    %v1211 = vmul.f32 %v1203, 1.442695
    %v1212 = vpow.pop %v1211
    %v1213 = vmul.f32 %v1204, 1.442695
    %v1214 = vpow.pop %v1213
    %v1215 = vmul.f32 %v1205, 1.442695
    %v1216 = vpow.pop %v1215
    %v1217 = vmul.f32 %v1206, 1.442695
    %v1218 = vpow.pop %v1217
    %v1219 = vmul.f32 %v1207, 1.442695
    %v1220 = vpow.pop %v1219
    %v1221 = vmul.f32 %v1208, 1.442695
    %v1222 = vpow.pop %v1221
    %v1223 = vmul.f32 %v1209, 1.442695
    %v1224 = vpow.pop %v1223
    %v1225 = vmul.f32 %v1210, 1.442695
    %v1226 = vpow.pop %v1225
    %v1227 = vsel %vm479, %v1212, 0.0
    %1228 = vadd.xlane.f32.xlu0 %v1227
    %v1229 = vpop.xlane.xlu0 %1228
    %v1230 = vsel %vm479, %v1214, 0.0
    %1231 = vadd.xlane.f32.xlu0 %v1230
    %v1232 = vpop.xlane.xlu0 %1231
    %v1233 = vsel %vm479, %v1216, 0.0
    %1234 = vadd.xlane.f32.xlu0 %v1233
    %v1235 = vpop.xlane.xlu0 %1234
    %v1236 = vsel %vm479, %v1218, 0.0
    %1237 = vadd.xlane.f32.xlu0 %v1236
    %v1238 = vpop.xlane.xlu0 %1237
    %v1239 = vsel %vm479, %v1220, 0.0
    %1240 = vadd.xlane.f32.xlu0 %v1239
    %v1241 = vpop.xlane.xlu0 %1240
    %v1242 = vsel %vm479, %v1222, 0.0
    %1243 = vadd.xlane.f32.xlu0 %v1242
    %v1244 = vpop.xlane.xlu0 %1243
    %v1245 = vsel %vm479, %v1224, 0.0
    %1246 = vadd.xlane.f32.xlu0 %v1245
    %v1247 = vpop.xlane.xlu0 %1246
    %v1248 = vsel %vm479, %v1226, 0.0
    %1249 = vadd.xlane.f32.xlu0 %v1248
    %v1250 = vpop.xlane.xlu0 %1249
    %v1251 = vrcp.pop %v1229
    %v1252 = vrcp.pop %v1232
    %v1253 = vrcp.pop %v1235
    %v1254 = vrcp.pop %v1238
    %v1255 = vrcp.pop %v1241
    %v1256 = vrcp.pop %v1244
    %v1257 = vrcp.pop %v1247
    %v1258 = vrcp.pop %v1250
    %v1259 = vmul.f32 %v1229, %v1251
    %v1260 = vmul.f32 %v1232, %v1252
    %v1261 = vmul.f32 %v1235, %v1253
    %v1262 = vmul.f32 %v1238, %v1254
    %v1263 = vmul.f32 %v1241, %v1255
    %v1264 = vmul.f32 %v1244, %v1256
    %v1265 = vmul.f32 %v1247, %v1257
    %v1266 = vmul.f32 %v1250, %v1258
    %v1267 = vsub.f32 2.0, %v1259
    %v1268 = vsub.f32 2.0, %v1260
    %v1269 = vsub.f32 2.0, %v1261
    %v1270 = vsub.f32 2.0, %v1262
    %v1271 = vsub.f32 2.0, %v1263
    %v1272 = vsub.f32 2.0, %v1264
    %v1273 = vsub.f32 2.0, %v1265
    %v1274 = vsub.f32 2.0, %v1266
    %v1275 = vmul.f32 %v1251, %v1267
    %v1276 = vmul.f32 %v1252, %v1268
    %v1277 = vmul.f32 %v1253, %v1269
    %v1278 = vmul.f32 %v1254, %v1270
    %v1279 = vmul.f32 %v1255, %v1271
    %v1280 = vmul.f32 %v1256, %v1272
    %v1281 = vmul.f32 %v1257, %v1273
    %v1282 = vmul.f32 %v1258, %v1274
    %v1283 = vmul.f32 %v1212, %v1275
    %v1284 = vmul.f32 %v1214, %v1276
    %v1285 = vmul.f32 %v1216, %v1277
    %v1286 = vmul.f32 %v1218, %v1278
    %v1287 = vmul.f32 %v1220, %v1279
    %v1288 = vmul.f32 %v1222, %v1280
    %v1289 = vmul.f32 %v1224, %v1281
    %v1290 = vmul.f32 %v1226, %v1282
    %v1292 = vsel %vm479, %v1285, 0
    %v1295 = vsel %vm479, %v1286, 0
    %1297 = vmatpush.msra.mxu0 0.0
    %1298 = vmatpush.msra.mxu0 0.0
    %1299 = vmatpush.msra.mxu0 0.0
    %1300 = vmatpush.msra.mxu0 0.0
    %1301 = vmatpush.msra.mxu0 0.0
    %1302 = vmatpush.msra.mxu0 0.0
    %1303 = vmatpush.msra.mxu0 0.0
    %1304 = vmatpush.msra.mxu0 0.0
    %1305 = vmatpush.msra.mxu0 0.0
    %1306 = vmatpush.msra.mxu0 0.0
    %1307 = vmatpush.msra.mxu0 0.0
    %1308 = vmatpush.msra.mxu0 0.0
    %1309 = vmatpush.msra.mxu0 0.0
    %1310 = vmatpush.msra.mxu0 0.0
    %1311 = vmatpush.msra.mxu0 %v1042
    %1312 = vmatpush.msra.mxu0 %v1039
    %1313 = vmatmul.f32.gmra.mxu0 %v1292
    %v1314 = vpop.f32.mrf.mxu0
    %v1315 = vadd.f32 0.0, %v1314
    %1316 = vmatmul.f32.gmra.mxu0 %v1295
    %v1317 = vpop.f32.mrf.mxu0
    %v1318 = vadd.f32 0.0, %v1317
    %1319 = vdwg.mxu0
    %v1321 = vsel %vm479, %v1283, 0
    %v1324 = vsel %vm479, %v1284, 0
    %1326 = vmatpush.msra.mxu0 0.0
    %1327 = vmatpush.msra.mxu0 0.0
    %1328 = vmatpush.msra.mxu0 0.0
    %1329 = vmatpush.msra.mxu0 0.0
    %1330 = vmatpush.msra.mxu0 0.0
    %1331 = vmatpush.msra.mxu0 0.0
    %1332 = vmatpush.msra.mxu0 0.0
    %1333 = vmatpush.msra.mxu0 0.0
    %1334 = vmatpush.msra.mxu0 0.0
    %1335 = vmatpush.msra.mxu0 0.0
    %1336 = vmatpush.msra.mxu0 0.0
    %1337 = vmatpush.msra.mxu0 0.0
    %1338 = vmatpush.msra.mxu0 0.0
    %1339 = vmatpush.msra.mxu0 0.0
    %1340 = vmatpush.msra.mxu0 %v1014
    %1341 = vmatpush.msra.mxu0 %v1011
    %1342 = vmatmul.f32.gmra.mxu0 %v1321
    %v1343 = vpop.f32.mrf.mxu0
    %v1344 = vadd.f32 %v1315, %v1343
    %1345 = vmatmul.f32.gmra.mxu0 %v1324
    %v1346 = vpop.f32.mrf.mxu0
    %v1347 = vadd.f32 %v1318, %v1346
    %1348 = vdwg.mxu0
    %v1350 = vsel %vm479, %v1287, 0
    %v1353 = vsel %vm479, %v1288, 0
    %1355 = vmatpush.msra.mxu0 0.0
    %1356 = vmatpush.msra.mxu0 0.0
    %1357 = vmatpush.msra.mxu0 0.0
    %1358 = vmatpush.msra.mxu0 0.0
    %1359 = vmatpush.msra.mxu0 0.0
    %1360 = vmatpush.msra.mxu0 0.0
    %1361 = vmatpush.msra.mxu0 0.0
    %1362 = vmatpush.msra.mxu0 0.0
    %1363 = vmatpush.msra.mxu0 0.0
    %1364 = vmatpush.msra.mxu0 0.0
    %1365 = vmatpush.msra.mxu0 0.0
    %1366 = vmatpush.msra.mxu0 0.0
    %1367 = vmatpush.msra.mxu0 0.0
    %1368 = vmatpush.msra.mxu0 0.0
    %1369 = vmatpush.msra.mxu0 %v1070
    %1370 = vmatpush.msra.mxu0 %v1067
    %1371 = vmatmul.f32.gmra.mxu0 %v1350
    %v1372 = vpop.f32.mrf.mxu0
    %v1373 = vadd.f32 0.0, %v1372
    %1374 = vmatmul.f32.gmra.mxu0 %v1353
    %v1375 = vpop.f32.mrf.mxu0
    %v1376 = vadd.f32 0.0, %v1375
    %1377 = vdwg.mxu0
    %v1378 = vadd.f32 %v1344, %v1373
    %v1379 = vadd.f32 %v1347, %v1376
    %v1381 = vsel %vm479, %v1289, 0
    %v1384 = vsel %vm479, %v1290, 0
    %1386 = vmatpush.msra.mxu0 0.0
    %1387 = vmatpush.msra.mxu0 0.0
    %1388 = vmatpush.msra.mxu0 0.0
    %1389 = vmatpush.msra.mxu0 0.0
    %1390 = vmatpush.msra.mxu0 0.0
    %1391 = vmatpush.msra.mxu0 0.0
    %1392 = vmatpush.msra.mxu0 0.0
    %1393 = vmatpush.msra.mxu0 0.0
    %1394 = vmatpush.msra.mxu0 0.0
    %1395 = vmatpush.msra.mxu0 0.0
    %1396 = vmatpush.msra.mxu0 0.0
    %1397 = vmatpush.msra.mxu0 0.0
    %1398 = vmatpush.msra.mxu0 0.0
    %1399 = vmatpush.msra.mxu0 0.0
    %1400 = vmatpush.msra.mxu0 %v1098
    %1401 = vmatpush.msra.mxu0 %v1095
    %1402 = vmatmul.f32.gmra.mxu0 %v1381
    %v1403 = vpop.f32.mrf.mxu0
    %v1404 = vadd.f32 0.0, %v1403
    %1405 = vmatmul.f32.gmra.mxu0 %v1384
    %v1406 = vpop.f32.mrf.mxu0
    %v1407 = vadd.f32 0.0, %v1406
    %1408 = vdwg.mxu0
    %v1409 = vadd.f32 %v1378, %v1404
    %v1410 = vadd.f32 %v1379, %v1407
    %s1411 = scalar_lea.vmem %s10, 1
    %v1412 = vld [vmem:[%s1411] sm:$0x1]
    %v1414 = vperm.slane %v1412, 0
    %v1416 = vadd.f32 %v1409, %v1414
    %v1417 = vadd.f32 %v1410, %v1414
    %v1418 = vadd.f32 %v924, %v1416
    %v1419 = vadd.f32 %v925, %v1417
    %s1420 = scalar_lea.vmem %s11, 1
    %v1421 = vld [vmem:[%s1420] sm:$0x1]
    %s1422 = scalar_lea.vmem %s12, 1
    %v1423 = vld [vmem:[%s1422] sm:$0x1]
    %v1424 = vsel %vm145, %v1418, 0.0
    %1425 = vadd.xlane.f32.xlu0 %v1424
    %v1426 = vpop.xlane.xlu0 %1425
    %v1427 = vsel %vm145, %v1419, 0.0
    %1428 = vadd.xlane.f32.xlu0 %v1427
    %v1429 = vpop.xlane.xlu0 %1428
    %v1430 = vmul.f32 %v1426, %v158
    %v1431 = vmul.f32 %v1429, %v158
    %v1432 = vmul.f32 %v1418, %v1418
    %v1433 = vmul.f32 %v1419, %v1419
    %v1434 = vsel %vm145, %v1432, 0.0
    %1435 = vadd.xlane.f32.xlu0 %v1434
    %v1436 = vpop.xlane.xlu0 %1435
    %v1437 = vsel %vm145, %v1433, 0.0
    %1438 = vadd.xlane.f32.xlu0 %v1437
    %v1439 = vpop.xlane.xlu0 %1438
    %v1440 = vmul.f32 %v1436, %v158
    %v1441 = vmul.f32 %v1439, %v158
    %v1442 = vmul.f32 %v1430, %v1430
    %v1443 = vmul.f32 %v1431, %v1431
    %v1444 = vsub.f32 %v1440, %v1442
    %v1445 = vsub.f32 %v1441, %v1443
    %v1446 = vmax.f32 %v1444, 0.0
    %v1447 = vmax.f32 %v1445, 0.0
    %v1448 = vsub.f32 %v1418, %v1430
    %v1449 = vsub.f32 %v1419, %v1431
    %v1450 = vadd.f32 %v1446, 1e-06
    %v1451 = vadd.f32 %v1447, 1e-06
    %v1452 = vrsqrt.pop %v1450
    %v1453 = vmul.f32 %v1452, %v1450
    %v1454 = vmul.f32 %v1453, %v1452
    %v1455 = vmul.f32 0.5, %v1454
    %v1456 = vsub.f32 1.5, %v1455
    %v1457 = vmul.f32 %v1452, %v1456
    %vm1458 = vweird.f32 %v1450
    %vm1459 = vweird.f32 %v1452
    %vm1460 = vmor %vm1458, %vm1459
    %v1461 = vsel %vm1460, %v1452, %v1457
    %v1462 = vrsqrt.pop %v1451
    %v1463 = vmul.f32 %v1462, %v1451
    %v1464 = vmul.f32 %v1463, %v1462
    %v1465 = vmul.f32 0.5, %v1464
    %v1466 = vsub.f32 1.5, %v1465
    %v1467 = vmul.f32 %v1462, %v1466
    %vm1468 = vweird.f32 %v1451
    %vm1469 = vweird.f32 %v1462
    %vm1470 = vmor %vm1468, %vm1469
    %v1471 = vsel %vm1470, %v1462, %v1467
    %v1472 = vmul.f32 %v1448, %v1461
    %v1473 = vmul.f32 %v1449, %v1471
    %v1475 = vperm.slane %v1421, 0
    %v1477 = vmul.f32 %v1472, %v1475
    %v1478 = vmul.f32 %v1473, %v1475
    %v1480 = vperm.slane %v1423, 0
    %v1482 = vadd.f32 %v1477, %v1480
    %v1483 = vadd.f32 %v1478, %v1480
    %s1484 = scalar_lea.vmem %s13, 32
    %v1485 = vld [vmem:[%s1484] sm:$0xff]
    %v1486 = vld [vmem:[%s1484 + $0x8] sm:$0xff]
    %v1487 = vld [vmem:[%s1484 + $0x10] sm:$0xff]
    %v1488 = vld [vmem:[%s1484 + $0x18] sm:$0xff]
    %s1489 = scalar_lea.vmem %s14, 1
    %v1490 = vld [vmem:[%s1489] sm:$0x1]
    %v1492 = vperm.slane %v1490, 0
    %v1495 = vsel %vm145, %v1482, 0
    %v1498 = vsel %vm145, %v1483, 0
    %1500 = vmatpush.msra.mxu0 0.0
    %1501 = vmatpush.msra.mxu0 0.0
    %1502 = vmatpush.msra.mxu0 0.0
    %1503 = vmatpush.msra.mxu0 0.0
    %1504 = vmatpush.msra.mxu0 0.0
    %1505 = vmatpush.msra.mxu0 0.0
    %1506 = vmatpush.msra.mxu0 0.0
    %1507 = vmatpush.msra.mxu0 0.0
    %1508 = vmatpush.msra.mxu0 0.0
    %1509 = vmatpush.msra.mxu0 0.0
    %1510 = vmatpush.msra.mxu0 0.0
    %1511 = vmatpush.msra.mxu0 0.0
    %1512 = vmatpush.msra.mxu0 %v1488
    %1513 = vmatpush.msra.mxu0 %v1487
    %1514 = vmatpush.msra.mxu0 %v1486
    %1515 = vmatpush.msra.mxu0 %v1485
    %1516 = vmatmul.f32.gmra.mxu0 %v1495
    %v1517 = vpop.f32.mrf.mxu0
    %v1518 = vadd.f32 %v1492, %v1517
    %1519 = vmatmul.f32.gmra.mxu0 %v1498
    %v1520 = vpop.f32.mrf.mxu0
    %v1521 = vadd.f32 %v1492, %v1520
    %1522 = vdwg.mxu0
    %v1523 = vmax.f32 %v1518, 0.0
    %v1524 = vmax.f32 %v1521, 0.0
    %s1525 = scalar_lea.vmem %s15, 64
    %v1526 = vld [vmem:[%s1525] sm:$0xff]
    %v1527 = vld [vmem:[%s1525 + $0x8] sm:$0xff]
    %v1528 = vld [vmem:[%s1525 + $0x10] sm:$0xff]
    %v1529 = vld [vmem:[%s1525 + $0x18] sm:$0xff]
    %v1530 = vld [vmem:[%s1525 + $0x20] sm:$0xff]
    %v1531 = vld [vmem:[%s1525 + $0x28] sm:$0xff]
    %v1532 = vld [vmem:[%s1525 + $0x30] sm:$0xff]
    %v1533 = vld [vmem:[%s1525 + $0x38] sm:$0xff]
    %s1534 = scalar_lea.vmem %s16, 1
    %v1535 = vld [vmem:[%s1534] sm:$0x1]
    %v1537 = vperm.slane %v1535, 0
    %v1540 = vsel %vm113, %v1523, 0
    %v1543 = vsel %vm113, %v1524, 0
    %1545 = vmatpush.msra.mxu0 0.0
    %1546 = vmatpush.msra.mxu0 0.0
    %1547 = vmatpush.msra.mxu0 0.0
    %1548 = vmatpush.msra.mxu0 0.0
    %1549 = vmatpush.msra.mxu0 0.0
    %1550 = vmatpush.msra.mxu0 0.0
    %1551 = vmatpush.msra.mxu0 0.0
    %1552 = vmatpush.msra.mxu0 0.0
    %1553 = vmatpush.msra.mxu0 %v1533
    %1554 = vmatpush.msra.mxu0 %v1532
    %1555 = vmatpush.msra.mxu0 %v1531
    %1556 = vmatpush.msra.mxu0 %v1530
    %1557 = vmatpush.msra.mxu0 %v1529
    %1558 = vmatpush.msra.mxu0 %v1528
    %1559 = vmatpush.msra.mxu0 %v1527
    %1560 = vmatpush.msra.mxu0 %v1526
    %1561 = vmatmul.f32.gmra.mxu0 %v1540
    %v1562 = vpop.f32.mrf.mxu0
    %v1563 = vadd.f32 %v1537, %v1562
    %1564 = vmatmul.f32.gmra.mxu0 %v1543
    %v1565 = vpop.f32.mrf.mxu0
    %v1566 = vadd.f32 %v1537, %v1565
    %1567 = vdwg.mxu0
    %v1568 = vadd.f32 %v1482, %v1563
    %v1569 = vadd.f32 %v1483, %v1566
    %s1570 = scalar_lea.vmem %s17, 1
    %v1571 = vld [vmem:[%s1570] sm:$0x1]
    %s1572 = scalar_lea.vmem %s18, 1
    %v1573 = vld [vmem:[%s1572] sm:$0x1]
    %v1574 = vsel %vm145, %v1568, 0.0
    %1575 = vadd.xlane.f32.xlu0 %v1574
    %v1576 = vpop.xlane.xlu0 %1575
    %v1577 = vsel %vm145, %v1569, 0.0
    %1578 = vadd.xlane.f32.xlu0 %v1577
    %v1579 = vpop.xlane.xlu0 %1578
    %v1580 = vmul.f32 %v1576, %v158
    %v1581 = vmul.f32 %v1579, %v158
    %v1582 = vmul.f32 %v1568, %v1568
    %v1583 = vmul.f32 %v1569, %v1569
    %v1584 = vsel %vm145, %v1582, 0.0
    %1585 = vadd.xlane.f32.xlu0 %v1584
    %v1586 = vpop.xlane.xlu0 %1585
    %v1587 = vsel %vm145, %v1583, 0.0
    %1588 = vadd.xlane.f32.xlu0 %v1587
    %v1589 = vpop.xlane.xlu0 %1588
    %v1590 = vmul.f32 %v1586, %v158
    %v1591 = vmul.f32 %v1589, %v158
    %v1592 = vmul.f32 %v1580, %v1580
    %v1593 = vmul.f32 %v1581, %v1581
    %v1594 = vsub.f32 %v1590, %v1592
    %v1595 = vsub.f32 %v1591, %v1593
    %v1596 = vmax.f32 %v1594, 0.0
    %v1597 = vmax.f32 %v1595, 0.0
    %v1598 = vsub.f32 %v1568, %v1580
    %v1599 = vsub.f32 %v1569, %v1581
    %v1600 = vadd.f32 %v1596, 1e-06
    %v1601 = vadd.f32 %v1597, 1e-06
    %v1602 = vrsqrt.pop %v1600
    %v1603 = vmul.f32 %v1602, %v1600
    %v1604 = vmul.f32 %v1603, %v1602
    %v1605 = vmul.f32 0.5, %v1604
    %v1606 = vsub.f32 1.5, %v1605
    %v1607 = vmul.f32 %v1602, %v1606
    %vm1608 = vweird.f32 %v1600
    %vm1609 = vweird.f32 %v1602
    %vm1610 = vmor %vm1608, %vm1609
    %v1611 = vsel %vm1610, %v1602, %v1607
    %v1612 = vrsqrt.pop %v1601
    %v1613 = vmul.f32 %v1612, %v1601
    %v1614 = vmul.f32 %v1613, %v1612
    %v1615 = vmul.f32 0.5, %v1614
    %v1616 = vsub.f32 1.5, %v1615
    %v1617 = vmul.f32 %v1612, %v1616
    %vm1618 = vweird.f32 %v1601
    %vm1619 = vweird.f32 %v1612
    %vm1620 = vmor %vm1618, %vm1619
    %v1621 = vsel %vm1620, %v1612, %v1617
    %v1622 = vmul.f32 %v1598, %v1611
    %v1623 = vmul.f32 %v1599, %v1621
    %v1625 = vperm.slane %v1571, 0
    %v1627 = vmul.f32 %v1622, %v1625
    %v1628 = vmul.f32 %v1623, %v1625
    %v1630 = vperm.slane %v1573, 0
    %v1632 = vadd.f32 %v1627, %v1630
    %v1633 = vadd.f32 %v1628, %v1630
    %v1634 = vsel %vm145, %v1632, -inf
    %v1635 = vrot.slane %v1634, 4
    %v1636 = vmax.f32 %v1634, %v1635
    %v1637 = vrot.slane %v1636, 2
    %v1638 = vmax.f32 %v1636, %v1637
    %v1639 = vrot.slane %v1638, 1
    %v1640 = vmax.f32 %v1638, %v1639
    %v1641 = vsel %vm145, %v1633, -inf
    %v1642 = vrot.slane %v1641, 4
    %v1643 = vmax.f32 %v1641, %v1642
    %v1644 = vrot.slane %v1643, 2
    %v1645 = vmax.f32 %v1643, %v1644
    %v1646 = vrot.slane %v1645, 1
    %v1647 = vmax.f32 %v1645, %v1646
    %vm1650 = vcmask 1041409
    %v1651 = vsel %vm1650, %v1647, %v1640
    %vm1653 = vcmask 1043459
    %v1654 = vsel %vm1653, %v1647, %v1640
    %vm1656 = vcmask 1045509
    %v1657 = vsel %vm1656, %v1647, %v1640
    %vm1659 = vcmask 1047559
    %v1660 = vsel %vm1659, %v1647, %v1640
    %vm1662 = vcmask 1041408
    %v1663 = vsel %vm1662, %v1651, %v1654
    %vm1664 = vcmask 1043456
    %v1665 = vsel %vm1664, %v1663, %v1657
    %vm1666 = vcmask 1045504
    %v1667 = vsel %vm1666, %v1665, %v1660
    %v1668 = vld [vmem:[%s19] sm:$0xff]
    %v1669 = vld [vmem:[%s19 + $0x8] sm:$0xff]
    %v1670 = vld [vmem:[%s19 + $0x10] sm:$0xff]
    %v1671 = vld [vmem:[%s19 + $0x18] sm:$0xff]
    %v1672 = vld [vmem:[%s20] sm:$0x1]
    %v1674 = vperm.slane %v1672, 0
    %v1677 = vsel %vm145, %v1667, 0
    %1679 = vmatpush.msra.mxu0 0.0
    %1680 = vmatpush.msra.mxu0 0.0
    %1681 = vmatpush.msra.mxu0 0.0
    %1682 = vmatpush.msra.mxu0 0.0
    %1683 = vmatpush.msra.mxu0 0.0
    %1684 = vmatpush.msra.mxu0 0.0
    %1685 = vmatpush.msra.mxu0 0.0
    %1686 = vmatpush.msra.mxu0 0.0
    %1687 = vmatpush.msra.mxu0 0.0
    %1688 = vmatpush.msra.mxu0 0.0
    %1689 = vmatpush.msra.mxu0 0.0
    %1690 = vmatpush.msra.mxu0 0.0
    %1691 = vmatpush.msra.mxu0 %v1671
    %1692 = vmatpush.msra.mxu0 %v1670
    %1693 = vmatpush.msra.mxu0 %v1669
    %1694 = vmatpush.msra.mxu0 %v1668
    %1695 = vmatmul.f32.gmra.mxu0 %v1677
    %v1696 = vpop.f32.mrf.mxu0
    %v1697 = vadd.f32 %v1674, %v1696
    %1698 = vdwg.mxu0
    %1699 = vst [vmem:[#allocation5] sm:$0xff] %v1697
    // Predicated region
    $region90: #{tpu_custom_call.1} parent=1 // pred_check
      _
    $region91: #{tpu_custom_call.1} parent=1 // pred_check_branch
      %1701 = sbr.rel (0) target = $region93
    $region92: #{tpu_custom_call.1} parent=1 // pred_region
      %1703 = vsyncadd [#allocation4], 0
      %s1705 = sshll.u32 [#allocation5], 4
      %s1706 = int_to_ptr.vmem [resolvable:$true] %s1705
      %s1707 = sshll.u32 %s21, 4
      %s1708 = int_to_ptr.hbm [resolvable:$true] %s1707
      %1710 = dma.vmem_to_hbm [thread:$0]  %s1706, 128, %s1708, [#allocation4]
    $region93: #{tpu_custom_call.1} parent=1 // pred_fallthru
      _
    // Predicated region
    $region94: #{tpu_custom_call.1} parent=1 // pred_check
      _
    $region95: #{tpu_custom_call.1} parent=1 // pred_check_branch
      %1712 = sbr.rel (0) target = $region97
    $region96: #{tpu_custom_call.1} parent=1 // pred_region
      %1714 = dma.done [#allocation4], 128
    $region97: #{tpu_custom_call.1} parent=1 // pred_fallthru
      _
    %1715 = vsyncpa [#allocation3], 1
    %1716 = vsyncpa [#allocation4], 1

</llo_original>
